<compile_context>
chip_gen: v7x
topology: tpu7x:2x2x1
jax: 0.10.0
libtpu: 0.0.40
codegen_flags: <defaults>
</compile_context>

<pallas_src>
import functools

import jax
import jax.numpy as jnp
from jax import lax
from jax.experimental import pallas as pl
from jax.experimental.pallas import tpu as pltpu


def _round_up(v, m):
    return ((v + m - 1) // m) * m


# --------------------------------------------------------------------------
# Fused 2-layer GCN forward kernel (one grid step = one output row tile)
# --------------------------------------------------------------------------
def gcn_fused_kernel(a_full_ref, a_rows_ref, x_ref, w1_ref, b1_ref,
                     w2_ref, b2_ref, o_ref, *, num_classes):
    # ---- Layer 1 over ALL nodes (every output row needs the full h) --------
    #   h = relu(A_hat @ (x @ W1) + b1)
    xw1 = jnp.dot(x_ref[...], w1_ref[...],
                  preferred_element_type=jnp.float32)               # [Np, Hp] f32
    h = jnp.dot(a_full_ref[...], xw1.astype(jnp.bfloat16),
                preferred_element_type=jnp.float32) + b1_ref[...]   # f32
    h = jnp.maximum(h, 0.0)                                         # relu (VPU, f32)

    # Dropout: module is evaluated with training=False -> identity.
    # TODO(synk): add stochastic dropout via pltpu.prng_random_bits if a
    # training-mode forward is ever needed.

    # ---- Layer 2, restricted to this step's output row tile ----------------
    #   z = A_hat[rows, :] @ (h @ W2) + b2 ;  out = masked log_softmax(z)
    hw2 = jnp.dot(h.astype(jnp.bfloat16), w2_ref[...],
                  preferred_element_type=jnp.float32)               # [Np, Cp] f32
    z = jnp.dot(a_rows_ref[...], hw2.astype(jnp.bfloat16),
                preferred_element_type=jnp.float32) + b2_ref[...]   # [tn, Cp]

    # Masked log_softmax over the first `num_classes` (real) lanes.
    col = lax.broadcasted_iota(jnp.int32, z.shape, 1)
    z = jnp.where(col < num_classes, z, jnp.float32(-1e30))
    m = jnp.max(z, axis=1, keepdims=True)
    lse = jnp.log(jnp.sum(jnp.exp(z - m), axis=1, keepdims=True)) + m
    o_ref[...] = (z - lse).astype(o_ref.dtype)


# --------------------------------------------------------------------------
# Wrapper: padding, one-time casts, single pallas_call
# --------------------------------------------------------------------------
def gcn_forward(a_hat, x, w1, b1, w2, b2, num_classes, *, row_tile=128):
    n, f = x.shape
    hidden = w1.shape[1]
    c = num_classes
    lane = 128

    # Pad node count to a row-tile multiple; pad hidden/class dims to 128
    # lanes (zero weights / zero bias -> padding stays exactly 0 through relu
    # and W2's zero rows, and is masked out of the log_softmax).
    np_ = max(_round_up(n, row_tile), row_tile)
    tn = row_tile
    hp = _round_up(hidden, lane)
    cp = _round_up(c, lane)

    pad_n = np_ - n
    if pad_n:
        a_hat = jnp.pad(a_hat, ((0, pad_n), (0, pad_n)))
        x = jnp.pad(x, ((0, pad_n), (0, 0)))

    w1p = jnp.pad(w1, ((0, 0), (0, hp - hidden)))
    b1p = jnp.pad(b1, ((0, 0), (0, hp - hidden)))
    w2p = jnp.pad(w2, ((0, hp - hidden), (0, cp - c)))
    b2p = jnp.pad(b2, ((0, 0), (0, cp - c)))

    # One-time bf16 casts for MXU operands (accumulation stays f32 in-kernel).
    a_bf = a_hat.astype(jnp.bfloat16)
    x_bf = x.astype(jnp.bfloat16)
    w1_bf = w1p.astype(jnp.bfloat16)
    w2_bf = w2p.astype(jnp.bfloat16)

    kernel = functools.partial(gcn_fused_kernel, num_classes=c)
    out = pl.pallas_call(
        kernel,
        out_shape=jax.ShapeDtypeStruct((np_, cp), jnp.float32),
        grid_spec=pltpu.PrefetchScalarGridSpec(
            num_scalar_prefetch=0,
            grid=(np_ // tn,),
            in_specs=[
                pl.BlockSpec((np_, np_), lambda i: (0, 0)),  # A_hat, resident
                pl.BlockSpec((tn, np_), lambda i: (i, 0)),   # A_hat row tile
                pl.BlockSpec((np_, f), lambda i: (0, 0)),    # x, resident
                pl.BlockSpec((f, hp), lambda i: (0, 0)),     # W1 (padded)
                pl.BlockSpec((1, hp), lambda i: (0, 0)),     # b1 (padded, f32)
                pl.BlockSpec((hp, cp), lambda i: (0, 0)),    # W2 (padded)
                pl.BlockSpec((1, cp), lambda i: (0, 0)),     # b2 (padded, f32)
            ],
            out_specs=pl.BlockSpec((tn, cp), lambda i: (i, 0)),
        ),
        compiler_params=pltpu.CompilerParams(
            dimension_semantics=("parallel",)),
    )(a_bf, a_bf, x_bf, w1_bf, b1p, w2_bf, b2p)

    return out[:n, :c]


# ------------------------------ JAX glue ------------------------------------
def build_graph_matrices(edge_index, edge_weight, num_nodes):
    """Dense A_hat = D^{-1/2}(A+I)D^{-1/2}, matching PyG gcn_norm with
    add_self_loops=True.  Computed once (GCNConv cached=True semantics)."""
    src, dst = edge_index[0], edge_index[1]
    loop = jnp.arange(num_nodes, dtype=src.dtype)
    src = jnp.concatenate([src, loop])
    dst = jnp.concatenate([dst, loop])
    w = jnp.concatenate([edge_weight, jnp.ones((num_nodes,), jnp.float32)])

    # A[i, j] = weight of edge j -> i  (aggregation is A @ X)
    a_raw = jnp.zeros((num_nodes, num_nodes), jnp.float32).at[dst, src].add(w)
    deg = a_raw.sum(axis=1)
    dinv = jnp.where(deg > 0, lax.rsqrt(deg), 0.0)
    return dinv[:, None] * a_raw * dinv[None, :]


def glorot(key, shape):
    fan_in, fan_out = shape
    limit = jnp.sqrt(6.0 / (fan_in + fan_out))
    return jax.random.uniform(key, shape, jnp.float32, -limit, limit)


def reference_forward(a_hat, x, w1, b1, w2, b2):
    h = jnp.maximum(a_hat @ (x @ w1) + b1, 0.0)
    z = a_hat @ (h @ w2) + b2
    return jax.nn.log_softmax(z, axis=1)


# ------------------------------- main ---------------------------------------
if __name__ == "__main__":
    N, F_IN, HIDDEN, C = 256, 16, 64, 4        # nodes, features, hidden, classes
    key = jax.random.PRNGKey(0)
    k_x, k_e, k_w1, k_w2 = jax.random.split(key, 4)

    # Node features, row-normalized (mimics normalize_features=True).
    x = jax.random.uniform(k_x, (N, F_IN), jnp.float32)
    x = x / jnp.clip(x.sum(axis=1, keepdims=True), 1e-6)

    # Deterministic random undirected graph (symmetrized edge list).
    n_e = 1024
    src = jax.random.randint(k_e, (n_e,), 0, N, dtype=jnp.int32)
    dst = (src + 1 + jax.random.randint(jax.random.fold_in(k_e, 1),
                                        (n_e,), 0, N - 1, dtype=jnp.int32)) % N
    edge_index = jnp.stack([jnp.concatenate([src, dst]),
                            jnp.concatenate([dst, src])])     # [2, 2*n_e]
    edge_weight = jnp.ones((2 * n_e,), jnp.float32)           # edge_attr None -> 1s

    a_hat = build_graph_matrices(edge_index, edge_weight, N)

    # GCNConv parameters: glorot weights, zero biases.
    w1 = glorot(k_w1, (F_IN, HIDDEN))
    b1 = jnp.zeros((1, HIDDEN), jnp.float32)
    w2 = glorot(k_w2, (HIDDEN, C))
    b2 = jnp.zeros((1, C), jnp.float32)

    out = gcn_forward(a_hat, x, w1, b1, w2, b2, C)
    out = jax.block_until_ready(out)

    ref = reference_forward(a_hat, x, w1, b1, w2, b2)
    assert out.shape == (N, C)
    max_err = jnp.max(jnp.abs(out - ref))
    assert jnp.allclose(out, ref, atol=1e-2, rtol=1e-2), (
        f"mismatch vs JAX reference, max abs err = {max_err}")

    print("KERNEL_OK")
</pallas_src>

<mosaic_0001>
module attributes {stable_mosaic.version = 11 : i64} {
  func.func @gcn_fused_kernel(%arg0: i32, %arg1: memref<256x256xbf16, #tpu.memory_space<vmem>>, %arg2: memref<128x256xbf16, #tpu.memory_space<vmem>>, %arg3: memref<256x16xbf16, #tpu.memory_space<vmem>>, %arg4: memref<16x128xbf16, #tpu.memory_space<vmem>>, %arg5: memref<1x128xf32, #tpu.memory_space<vmem>>, %arg6: memref<128x128xbf16, #tpu.memory_space<vmem>>, %arg7: memref<1x128xf32, #tpu.memory_space<vmem>>, %arg8: memref<128x128xf32, #tpu.memory_space<vmem>>) attributes {dimension_semantics = [#tpu.dimension_semantics<parallel>], iteration_bounds = array<i64: 2>, scalar_prefetch = 0 : i64, scratch_operands = 0 : i64, tpu.core_type = #tpu.core_type<tc>, window_params = [{pipeline_mode = #tpu.pipeline_mode<synchronous>, transform_indices = @transform_0, window_bounds = array<i64: 256, 256>}, {transform_indices = @transform_1, window_bounds = array<i64: 128, 256>}, {pipeline_mode = #tpu.pipeline_mode<synchronous>, transform_indices = @transform_2, window_bounds = array<i64: 256, 16>}, {pipeline_mode = #tpu.pipeline_mode<synchronous>, transform_indices = @transform_3, window_bounds = array<i64: 16, 128>}, {pipeline_mode = #tpu.pipeline_mode<synchronous>, transform_indices = @transform_4, window_bounds = array<i64: 1, 128>}, {pipeline_mode = #tpu.pipeline_mode<synchronous>, transform_indices = @transform_5, window_bounds = array<i64: 128, 128>}, {pipeline_mode = #tpu.pipeline_mode<synchronous>, transform_indices = @transform_6, window_bounds = array<i64: 1, 128>}, {transform_indices = @transform_7, window_bounds = array<i64: 128, 128>}]} {
    %c0 = arith.constant 0 : index
    %c0_0 = arith.constant 0 : index
    %0 = vector.load %arg3[%c0, %c0_0] : memref<256x16xbf16, #tpu.memory_space<vmem>>, vector<256x16xbf16>
    %c0_1 = arith.constant 0 : index
    %c0_2 = arith.constant 0 : index
    %1 = vector.load %arg4[%c0_1, %c0_2] : memref<16x128xbf16, #tpu.memory_space<vmem>>, vector<16x128xbf16>
    %cst = arith.constant dense<0.000000e+00> : vector<256x128xf32>
    %2 = tpu.matmul %0, %1, %cst {dimension_numbers = #tpu.dot_dimension_numbers<[1], [0], [0], [1], [0, 0, 1, 1], [], []>} : vector<256x16xbf16>, vector<16x128xbf16>, vector<256x128xf32> -> vector<256x128xf32>
    %c0_3 = arith.constant 0 : index
    %c0_4 = arith.constant 0 : index
    %3 = vector.load %arg1[%c0_3, %c0_4] : memref<256x256xbf16, #tpu.memory_space<vmem>>, vector<256x256xbf16>
    %4 = arith.truncf %2 : vector<256x128xf32> to vector<256x128xbf16>
    %cst_5 = arith.constant dense<0.000000e+00> : vector<256x128xf32>
    %5 = tpu.matmul %3, %4, %cst_5 {dimension_numbers = #tpu.dot_dimension_numbers<[1], [0], [0], [1], [0, 0, 1, 1], [], []>} : vector<256x256xbf16>, vector<256x128xbf16>, vector<256x128xf32> -> vector<256x128xf32>
    %c0_6 = arith.constant 0 : index
    %c0_7 = arith.constant 0 : index
    %6 = vector.load %arg5[%c0_6, %c0_7] : memref<1x128xf32, #tpu.memory_space<vmem>>, vector<1x128xf32>
    %7 = vector.broadcast %6 : vector<1x128xf32> to vector<256x128xf32>
    %8 = arith.addf %5, %7 : vector<256x128xf32>
    %cst_8 = arith.constant 0.000000e+00 : f32
    %9 = vector.broadcast %cst_8 : f32 to vector<256x128xf32>
    %10 = arith.maximumf %8, %9 : vector<256x128xf32>
    %11 = arith.truncf %10 : vector<256x128xf32> to vector<256x128xbf16>
    %c0_9 = arith.constant 0 : index
    %c0_10 = arith.constant 0 : index
    %12 = vector.load %arg6[%c0_9, %c0_10] : memref<128x128xbf16, #tpu.memory_space<vmem>>, vector<128x128xbf16>
    %cst_11 = arith.constant dense<0.000000e+00> : vector<256x128xf32>
    %13 = tpu.matmul %11, %12, %cst_11 {dimension_numbers = #tpu.dot_dimension_numbers<[1], [0], [0], [1], [0, 0, 1, 1], [], []>} : vector<256x128xbf16>, vector<128x128xbf16>, vector<256x128xf32> -> vector<256x128xf32>
    %c0_12 = arith.constant 0 : index
    %c0_13 = arith.constant 0 : index
    %14 = vector.load %arg2[%c0_12, %c0_13] : memref<128x256xbf16, #tpu.memory_space<vmem>>, vector<128x256xbf16>
    %15 = arith.truncf %13 : vector<256x128xf32> to vector<256x128xbf16>
    %cst_14 = arith.constant dense<0.000000e+00> : vector<128x128xf32>
    %16 = tpu.matmul %14, %15, %cst_14 {dimension_numbers = #tpu.dot_dimension_numbers<[1], [0], [0], [1], [0, 0, 1, 1], [], []>} : vector<128x256xbf16>, vector<256x128xbf16>, vector<128x128xf32> -> vector<128x128xf32>
    %c0_15 = arith.constant 0 : index
    %c0_16 = arith.constant 0 : index
    %17 = vector.load %arg7[%c0_15, %c0_16] : memref<1x128xf32, #tpu.memory_space<vmem>>, vector<1x128xf32>
    %18 = vector.broadcast %17 : vector<1x128xf32> to vector<128x128xf32>
    %19 = arith.addf %16, %18 : vector<128x128xf32>
    %20 = tpu.iota {dimensions = array<i32: 1>} : vector<128x128xi32>
    %c4_i32 = arith.constant 4 : i32
    %21 = vector.broadcast %c4_i32 : i32 to vector<128x128xi32>
    %22 = arith.cmpi slt, %20, %21 : vector<128x128xi32>
    %cst_17 = arith.constant -1.000000e+30 : f32
    %23 = vector.broadcast %cst_17 : f32 to vector<128x128xf32>
    %24 = arith.select %22, %19, %23 : vector<128x128xi1>, vector<128x128xf32>
    %cst_18 = arith.constant dense<0xFF800000> : vector<128xf32>
    %25 = vector.multi_reduction <maximumf>, %24, %cst_18 [1] : vector<128x128xf32> to vector<128xf32>
    %26 = vector.shape_cast %25 : vector<128xf32> to vector<128x1xf32>
    %27 = vector.broadcast %26 : vector<128x1xf32> to vector<128x128xf32>
    %28 = arith.subf %24, %27 : vector<128x128xf32>
    %29 = math.exp %28 : vector<128x128xf32>
    %cst_19 = arith.constant dense<0.000000e+00> : vector<128xf32>
    %30 = vector.multi_reduction <add>, %29, %cst_19 [1] : vector<128x128xf32> to vector<128xf32>
    %31 = vector.shape_cast %30 : vector<128xf32> to vector<128x1xf32>
    %32 = math.log %31 : vector<128x1xf32>
    %33 = arith.addf %32, %26 : vector<128x1xf32>
    %34 = vector.broadcast %33 : vector<128x1xf32> to vector<128x128xf32>
    %35 = arith.subf %24, %34 : vector<128x128xf32>
    %c0_20 = arith.constant 0 : index
    %c0_21 = arith.constant 0 : index
    %36 = vector.load %arg8[%c0_20, %c0_21] : memref<128x128xf32, #tpu.memory_space<vmem>>, vector<128x128xf32>
    tpu.vector_store %arg8[%c0_20, %c0_21], %35 {strides = array<i32>} : memref<128x128xf32, #tpu.memory_space<vmem>>, vector<128x128xf32>,
    return
  }
  func.func @transform_0(%arg0: i32) -> (i32, i32) {
    %c0_i32 = arith.constant 0 : i32
    %c0_i32_0 = arith.constant 0 : i32
    %c0_i32_1 = arith.constant 0 : i32
    return %c0_i32, %c0_i32_0 : i32, i32
  }
  func.func @transform_1(%arg0: i32) -> (i32, i32) {
    %c0_i32 = arith.constant 0 : i32
    %c0_i32_0 = arith.constant 0 : i32
    return %arg0, %c0_i32 : i32, i32
  }
  func.func @transform_2(%arg0: i32) -> (i32, i32) {
    %c0_i32 = arith.constant 0 : i32
    %c0_i32_0 = arith.constant 0 : i32
    %c0_i32_1 = arith.constant 0 : i32
    return %c0_i32, %c0_i32_0 : i32, i32
  }
  func.func @transform_3(%arg0: i32) -> (i32, i32) {
    %c0_i32 = arith.constant 0 : i32
    %c0_i32_0 = arith.constant 0 : i32
    %c0_i32_1 = arith.constant 0 : i32
    return %c0_i32, %c0_i32_0 : i32, i32
  }
  func.func @transform_4(%arg0: i32) -> (i32, i32) {
    %c0_i32 = arith.constant 0 : i32
    %c0_i32_0 = arith.constant 0 : i32
    %c0_i32_1 = arith.constant 0 : i32
    return %c0_i32, %c0_i32_0 : i32, i32
  }
  func.func @transform_5(%arg0: i32) -> (i32, i32) {
    %c0_i32 = arith.constant 0 : i32
    %c0_i32_0 = arith.constant 0 : i32
    %c0_i32_1 = arith.constant 0 : i32
    return %c0_i32, %c0_i32_0 : i32, i32
  }
  func.func @transform_6(%arg0: i32) -> (i32, i32) {
    %c0_i32 = arith.constant 0 : i32
    %c0_i32_0 = arith.constant 0 : i32
    %c0_i32_1 = arith.constant 0 : i32
    return %c0_i32, %c0_i32_0 : i32, i32
  }
  func.func @transform_7(%arg0: i32) -> (i32, i32) {
    %c0_i32 = arith.constant 0 : i32
    %c0_i32_0 = arith.constant 0 : i32
    return %arg0, %c0_i32 : i32, i32
  }
}

</mosaic_0001>

<llo_original>
// kernel: tpu_custom_call.1
$region0: #{tpu_custom_call.1}
  #allocation0 [shape = 'u32[]', space=smem, size = 0x4, offset = 0x4, fixed_abs, tag = 'smem constant byte address 0x4 - core index']
  #allocation1 [shape = 'u32[144,128]{1,0:T(1,128)}', space=vmem, size = 0x12000, scoped, tag = 'internal scratch']
  %s0 = inlined_call_operand.hbm [shape: bf16[256,256], index: 0, kind: input, shape index: {}]
  %s1 = inlined_call_operand.hbm [shape: bf16[256,256], index: 1, kind: input, shape index: {}]
  %s2 = inlined_call_operand.vmem [shape: bf16[256,16], index: 2, kind: input, shape index: {}]
  %s3 = inlined_call_operand.vmem [shape: bf16[16,128], index: 3, kind: input, shape index: {}]
  %s4 = inlined_call_operand.vmem [shape: f32[1,128], index: 4, kind: input, shape index: {}]
  %s5 = inlined_call_operand.vmem [shape: bf16[128,128], index: 5, kind: input, shape index: {}]
  %s6 = inlined_call_operand.vmem [shape: f32[1,128], index: 6, kind: input, shape index: {}]
  %s7 = inlined_call_operand.hbm [shape: f32[256,128], index: 7, kind: output, shape index: {}]
  %s8 = sld [smem:[#allocation0]]
  $region69: #{tpu_custom_call.1} parent=0
    _
  %s10 = ssub.s32 1, %s8
  %s11 = scalar_select 0, %s10, %s8
  $region1: #{tpu_custom_call.1} parent=0
    #allocation2 [shape = 'u8[131072]{0}', space=vmem, size = 0x20000, scoped, tag = 'input window, operand 0, single buffered']
    #allocation3 [shape = 's32[2]{0}', space=sflag, size = 0x8, scoped, tag = 'scoped memory for tpu_custom_call.1']
    #allocation4 [shape = 's32[2]{0}', space=sflag, size = 0x8, scoped, tag = 'scoped memory for tpu_custom_call.1']
    #allocation5 [shape = 'u8[131072]{0}', space=vmem, size = 0x20000, scoped, tag = 'input window, operand 1']
    #allocation6 [shape = 's32[2]{0}', space=sflag, size = 0x8, scoped, tag = 'scoped memory for tpu_custom_call.1']
    #allocation7 [shape = 'u8[131072]{0}', space=vmem, size = 0x20000, scoped, tag = 'output window, operand 0']
    %12 = vsyncpa [#allocation3], 0
    %13 = vsyncpa [#allocation6], 0
    %s14 = scalar_lea.sflag [#allocation6], 1
    %15 = vsyncpa %s14, 0
    %16 = vsyncpa [#allocation4], 0
    %s17 = scalar_lea.sflag [#allocation4], 1
    %18 = vsyncpa %s17, 0
    loop: start=0, step=1, limit=4
    $region2: #{tpu_custom_call.1} parent=1 // loop_pre_header
      _
    $region3: #{tpu_custom_call.1} parent=1 // loop_header
      %s20 = sphi 0, %s24
      %p21 = scmp.ge.s32.totalorder %s20, 4
      %s28 = sphi 0, %s28
      %s30 = sphi 0, %s28
      %s31 = sphi 0, %s30
      %s45 = sphi 0, %s31
      %s51 = sphi 0, %s53
      %s54 = sphi 0, %s51
      %s55 = sphi 0, %s54
      %s71 = sphi 0, %s55
      %s75 = sphi 0, %s75
      %s77 = sphi 0, %s75
      %s78 = sphi 0, %s77
      %s92 = sphi 0, %s78
      %s96 = sphi 0, %s96
      %s98 = sphi 0, %s96
      %s99 = sphi 0, %s98
      %s113 = sphi 0, %s99
      %s117 = sphi 0, %s117
      %s119 = sphi 0, %s117
      %s120 = sphi 0, %s119
      %s134 = sphi 0, %s120
      %s138 = sphi 0, %s138
      %s140 = sphi 0, %s138
      %s141 = sphi 0, %s140
      %s155 = sphi 0, %s141
      %s159 = sphi 0, %s159
      %s161 = sphi 0, %s159
      %s162 = sphi 0, %s161
      %s176 = sphi 0, %s162
      %s182 = sphi 0, %s184
      %s185 = sphi 0, %s182
      %s186 = sphi 0, %s185
      %s202 = sphi 0, %s186
    $region4: #{tpu_custom_call.1} parent=1 // loop_header_branch
      %23 = sbr.rel (%p21) target = $region8
    $region5: #{tpu_custom_call.1} parent=1 // loop_body
      %s25 = ssub.s32 %s20, 1
      %s26 = ssub.s32 %s20, 2
      %s27 = sadd.s32 %s20, 1
      %s29 = sadd.s32 %s28, 1
      %p32 = scmp.eq.s32.totalorder %s20, 1
      %p33 = scmp.ne.s32.totalorder %s28, %s30
      %p34 = scmp.eq.s32.totalorder %s20, 0
      %p35 = por %p33, %p34
      %p36 = scmp.ne.s32.totalorder %s28, %s30
      %p37 = scmp.eq.s32.totalorder %s25, 1
      %p38 = por %p36, %p37
      %p39 = scmp.ne.s32.totalorder %s30, %s31
      %p40 = scmp.eq.s32.totalorder %s25, 0
      %p41 = por %p39, %p40
      %p42 = scmp.ne.s32.totalorder %s30, %s31
      %p43 = scmp.eq.s32.totalorder %s26, 1
      %p44 = por %p42, %p43
      %p46 = scmp.ne.s32.totalorder %s31, %s45
      %p47 = scmp.eq.s32.totalorder %s26, 0
      %p48 = por %p46, %p47
      %s49 = ssub.s32 %s20, %s27
      %p50 = scmp.eq.s32.totalorder %s49, 0
      %s52 = sadd.s32 %s51, 1
      %s53 = scalar_select %p50, %s51, %s52
      %p56 = pneg %p50
      %p57 = scmp.eq.s32.totalorder %s20, 1
      %p58 = por %p56, %p57
      %p59 = scmp.ne.s32.totalorder %s51, %s54
      %p60 = scmp.eq.s32.totalorder %s20, 0
      %p61 = por %p59, %p60
      %p62 = scmp.ne.s32.totalorder %s51, %s54
      %p63 = scmp.eq.s32.totalorder %s25, 1
      %p64 = por %p62, %p63
      %p65 = scmp.ne.s32.totalorder %s54, %s55
      %p66 = scmp.eq.s32.totalorder %s25, 0
      %p67 = por %p65, %p66
      %p68 = scmp.ne.s32.totalorder %s54, %s55
      %p69 = scmp.eq.s32.totalorder %s26, 1
      %p70 = por %p68, %p69
      %p72 = scmp.ne.s32.totalorder %s55, %s71
      %p73 = scmp.eq.s32.totalorder %s26, 0
      %p74 = por %p72, %p73
      %s76 = sadd.s32 %s75, 1
      %p79 = scmp.eq.s32.totalorder %s20, 1
      %p80 = scmp.ne.s32.totalorder %s75, %s77
      %p81 = scmp.eq.s32.totalorder %s20, 0
      %p82 = por %p80, %p81
      %p83 = scmp.ne.s32.totalorder %s75, %s77
      %p84 = scmp.eq.s32.totalorder %s25, 1
      %p85 = por %p83, %p84
      %p86 = scmp.ne.s32.totalorder %s77, %s78
      %p87 = scmp.eq.s32.totalorder %s25, 0
      %p88 = por %p86, %p87
      %p89 = scmp.ne.s32.totalorder %s77, %s78
      %p90 = scmp.eq.s32.totalorder %s26, 1
      %p91 = por %p89, %p90
      %p93 = scmp.ne.s32.totalorder %s78, %s92
      %p94 = scmp.eq.s32.totalorder %s26, 0
      %p95 = por %p93, %p94
      %s97 = sadd.s32 %s96, 1
      %p100 = scmp.eq.s32.totalorder %s20, 1
      %p101 = scmp.ne.s32.totalorder %s96, %s98
      %p102 = scmp.eq.s32.totalorder %s20, 0
      %p103 = por %p101, %p102
      %p104 = scmp.ne.s32.totalorder %s96, %s98
      %p105 = scmp.eq.s32.totalorder %s25, 1
      %p106 = por %p104, %p105
      %p107 = scmp.ne.s32.totalorder %s98, %s99
      %p108 = scmp.eq.s32.totalorder %s25, 0
      %p109 = por %p107, %p108
      %p110 = scmp.ne.s32.totalorder %s98, %s99
      %p111 = scmp.eq.s32.totalorder %s26, 1
      %p112 = por %p110, %p111
      %p114 = scmp.ne.s32.totalorder %s99, %s113
      %p115 = scmp.eq.s32.totalorder %s26, 0
      %p116 = por %p114, %p115
      %s118 = sadd.s32 %s117, 1
      %p121 = scmp.eq.s32.totalorder %s20, 1
      %p122 = scmp.ne.s32.totalorder %s117, %s119
      %p123 = scmp.eq.s32.totalorder %s20, 0
      %p124 = por %p122, %p123
      %p125 = scmp.ne.s32.totalorder %s117, %s119
      %p126 = scmp.eq.s32.totalorder %s25, 1
      %p127 = por %p125, %p126
      %p128 = scmp.ne.s32.totalorder %s119, %s120
      %p129 = scmp.eq.s32.totalorder %s25, 0
      %p130 = por %p128, %p129
      %p131 = scmp.ne.s32.totalorder %s119, %s120
      %p132 = scmp.eq.s32.totalorder %s26, 1
      %p133 = por %p131, %p132
      %p135 = scmp.ne.s32.totalorder %s120, %s134
      %p136 = scmp.eq.s32.totalorder %s26, 0
      %p137 = por %p135, %p136
      %s139 = sadd.s32 %s138, 1
      %p142 = scmp.eq.s32.totalorder %s20, 1
      %p143 = scmp.ne.s32.totalorder %s138, %s140
      %p144 = scmp.eq.s32.totalorder %s20, 0
      %p145 = por %p143, %p144
      %p146 = scmp.ne.s32.totalorder %s138, %s140
      %p147 = scmp.eq.s32.totalorder %s25, 1
      %p148 = por %p146, %p147
      %p149 = scmp.ne.s32.totalorder %s140, %s141
      %p150 = scmp.eq.s32.totalorder %s25, 0
      %p151 = por %p149, %p150
      %p152 = scmp.ne.s32.totalorder %s140, %s141
      %p153 = scmp.eq.s32.totalorder %s26, 1
      %p154 = por %p152, %p153
      %p156 = scmp.ne.s32.totalorder %s141, %s155
      %p157 = scmp.eq.s32.totalorder %s26, 0
      %p158 = por %p156, %p157
      %s160 = sadd.s32 %s159, 1
      %p163 = scmp.eq.s32.totalorder %s20, 1
      %p164 = scmp.ne.s32.totalorder %s159, %s161
      %p165 = scmp.eq.s32.totalorder %s20, 0
      %p166 = por %p164, %p165
      %p167 = scmp.ne.s32.totalorder %s159, %s161
      %p168 = scmp.eq.s32.totalorder %s25, 1
      %p169 = por %p167, %p168
      %p170 = scmp.ne.s32.totalorder %s161, %s162
      %p171 = scmp.eq.s32.totalorder %s25, 0
      %p172 = por %p170, %p171
      %p173 = scmp.ne.s32.totalorder %s161, %s162
      %p174 = scmp.eq.s32.totalorder %s26, 1
      %p175 = por %p173, %p174
      %p177 = scmp.ne.s32.totalorder %s162, %s176
      %p178 = scmp.eq.s32.totalorder %s26, 0
      %p179 = por %p177, %p178
      %s180 = ssub.s32 %s20, %s27
      %p181 = scmp.eq.s32.totalorder %s180, 0
      %s183 = sadd.s32 %s182, 1
      %s184 = scalar_select %p181, %s182, %s183
      %p187 = pneg %p181
      %p188 = scmp.eq.s32.totalorder %s20, 1
      %p189 = por %p187, %p188
      %p190 = scmp.ne.s32.totalorder %s182, %s185
      %p191 = scmp.eq.s32.totalorder %s20, 0
      %p192 = por %p190, %p191
      %p193 = scmp.ne.s32.totalorder %s182, %s185
      %p194 = scmp.eq.s32.totalorder %s25, 1
      %p195 = por %p193, %p194
      %p196 = scmp.ne.s32.totalorder %s185, %s186
      %p197 = scmp.eq.s32.totalorder %s25, 0
      %p198 = por %p196, %p197
      %p199 = scmp.ne.s32.totalorder %s185, %s186
      %p200 = scmp.eq.s32.totalorder %s26, 1
      %p201 = por %p199, %p200
      %p203 = scmp.ne.s32.totalorder %s186, %s202
      %p204 = scmp.eq.s32.totalorder %s26, 0
      %p205 = por %p203, %p204
      %p206 = scmp.le.s32.totalorder 1, %s20
      %p207 = scmp.lt.s32.totalorder %s20, 3
      %p208 = pnand %p206, %p207
      %p209 = pneg %p208
      // Predicated region
      $region9: #{tpu_custom_call.1} parent=5 // pred_check
        _
      $region10: #{tpu_custom_call.1} parent=5 // pred_check_branch
        %211 = sbr.rel (%p208) target = $region12
      $region11: #{tpu_custom_call.1} parent=5 // pred_region
        %s212 = ssub.s32 %s20, 1
        // Predicated region
        $region13: #{tpu_custom_call.1} parent=11 // pred_check
          %p213 = pneg %p41
        $region14: #{tpu_custom_call.1} parent=11 // pred_check_branch
          %215 = sbr.rel (%p213) target = $region16
        $region15: #{tpu_custom_call.1} parent=11 // pred_region
          %s217 = ssub.s32 4096, 4096
          %218 = vsyncadd [#allocation3], %s217
          %s219 = sshll.u32 [#allocation2], 4
          %s220 = int_to_ptr.vmem [resolvable:$true] %s219
          %225 = dma.hbm_to_vmem [thread:$0]  %s0, 4096, %s220, [#allocation3], 128, 128, 8
        $region16: #{tpu_custom_call.1} parent=11 // pred_fallthru
          _
        // Predicated region
        $region17: #{tpu_custom_call.1} parent=11 // pred_check
          %p226 = pneg %p88
        $region18: #{tpu_custom_call.1} parent=11 // pred_check_branch
          %228 = sbr.rel (%p226) target = $region20
        $region19: #{tpu_custom_call.1} parent=11 // pred_region
          _
        $region20: #{tpu_custom_call.1} parent=11 // pred_fallthru
          _
        // Predicated region
        $region21: #{tpu_custom_call.1} parent=11 // pred_check
          %p229 = pneg %p109
        $region22: #{tpu_custom_call.1} parent=11 // pred_check_branch
          %231 = sbr.rel (%p229) target = $region24
        $region23: #{tpu_custom_call.1} parent=11 // pred_region
          _
        $region24: #{tpu_custom_call.1} parent=11 // pred_fallthru
          _
        // Predicated region
        $region25: #{tpu_custom_call.1} parent=11 // pred_check
          %p232 = pneg %p130
        $region26: #{tpu_custom_call.1} parent=11 // pred_check_branch
          %234 = sbr.rel (%p232) target = $region28
        $region27: #{tpu_custom_call.1} parent=11 // pred_region
          _
        $region28: #{tpu_custom_call.1} parent=11 // pred_fallthru
          _
        // Predicated region
        $region29: #{tpu_custom_call.1} parent=11 // pred_check
          %p235 = pneg %p151
        $region30: #{tpu_custom_call.1} parent=11 // pred_check_branch
          %237 = sbr.rel (%p235) target = $region32
        $region31: #{tpu_custom_call.1} parent=11 // pred_region
          _
        $region32: #{tpu_custom_call.1} parent=11 // pred_fallthru
          _
        // Predicated region
        $region33: #{tpu_custom_call.1} parent=11 // pred_check
          %p238 = pneg %p172
        $region34: #{tpu_custom_call.1} parent=11 // pred_check_branch
          %240 = sbr.rel (%p238) target = $region36
        $region35: #{tpu_custom_call.1} parent=11 // pred_region
          _
        $region36: #{tpu_custom_call.1} parent=11 // pred_fallthru
          _
      $region12: #{tpu_custom_call.1} parent=5 // pred_fallthru
        _
      %p241 = scmp.lt.s32.totalorder %s20, 2
      // Predicated region
      $region37: #{tpu_custom_call.1} parent=5 // pred_check
        %p242 = pneg %p241
      $region38: #{tpu_custom_call.1} parent=5 // pred_check_branch
        %244 = sbr.rel (%p242) target = $region40
      $region39: #{tpu_custom_call.1} parent=5 // pred_region
        // Predicated region
        $region41: #{tpu_custom_call.1} parent=39 // pred_check
          %p245 = pneg %p61
        $region42: #{tpu_custom_call.1} parent=39 // pred_check_branch
          %247 = sbr.rel (%p245) target = $region44
        $region43: #{tpu_custom_call.1} parent=39 // pred_region
          %s248 = sand.u32 %s51, 1
          %s249 = scalar_lea.sflag [#allocation6], %s248
          %s250 = sand.u32 %s51, 1
          %s251 = smul.addr %s250, 128
          %s252 = scalar_lea.vmem [#allocation5], %s251
          %s253 = smul.u32 16, %s20
          %s255 = ssub.s32 2048, 2048
          %256 = vsyncadd %s249, %s255
          %s257 = smul.addr %s253, 2
          %s258 = smul.addr %s257, 64
          %s259 = scalar_lea.hbm %s1, %s258
          %s260 = sshll.u32 %s252, 4
          %s261 = int_to_ptr.vmem [resolvable:$true] %s260
          %266 = dma.hbm_to_vmem [thread:$0]  %s259, 2048, %s261, %s249, 128, 128, 8
        $region44: #{tpu_custom_call.1} parent=39 // pred_fallthru
          _
      $region40: #{tpu_custom_call.1} parent=5 // pred_fallthru
        _
      %p267 = scmp.le.s32.totalorder 1, %s20
      %p268 = scmp.lt.s32.totalorder %s20, 3
      %p269 = pnand %p267, %p268
      %p270 = pneg %p269
      // Predicated region
      $region45: #{tpu_custom_call.1} parent=5 // pred_check
        _
      $region46: #{tpu_custom_call.1} parent=5 // pred_check_branch
        %272 = sbr.rel (%p269) target = $region48
      $region47: #{tpu_custom_call.1} parent=5 // pred_region
        %s273 = ssub.s32 %s20, 1
        // Predicated region
        $region49: #{tpu_custom_call.1} parent=47 // pred_check
          %p274 = pneg %p41
        $region50: #{tpu_custom_call.1} parent=47 // pred_check_branch
          %276 = sbr.rel (%p274) target = $region52
        $region51: #{tpu_custom_call.1} parent=47 // pred_region
          %277 = dma.done [#allocation3], 4096
        $region52: #{tpu_custom_call.1} parent=47 // pred_fallthru
          _
        %s278 = sand.u32 %s54, 1
        %s279 = scalar_lea.sflag [#allocation6], %s278
        %s280 = sand.u32 %s54, 1
        %s281 = smul.addr %s280, 128
        %s282 = scalar_lea.vmem [#allocation5], %s281
        // Predicated region
        $region53: #{tpu_custom_call.1} parent=47 // pred_check
          %p283 = pneg %p67
        $region54: #{tpu_custom_call.1} parent=47 // pred_check_branch
          %285 = sbr.rel (%p283) target = $region56
        $region55: #{tpu_custom_call.1} parent=47 // pred_region
          %286 = dma.done %s279, 2048
        $region56: #{tpu_custom_call.1} parent=47 // pred_fallthru
          _
        %p287 = pneg %p41
        %p288 = pneg %p38
        %s289 = sand.u32 %s54, 1
        %s290 = scalar_lea.sflag [#allocation6], %s289
        %s291 = sand.u32 %s54, 1
        %s292 = smul.addr %s291, 128
        %s293 = scalar_lea.vmem [#allocation5], %s292
        %p294 = pneg %p67
        %p295 = pneg %p64
        %p296 = pneg %p88
        %p297 = pneg %p85
        %p298 = pneg %p109
        %p299 = pneg %p106
        %p300 = pneg %p130
        %p301 = pneg %p127
        %p302 = pneg %p151
        %p303 = pneg %p148
        %p304 = pneg %p172
        %p305 = pneg %p169
        %p306 = pneg %p198
        %p307 = pneg %p195
        %s308 = sand.u32 %s185, 1
        %s309 = scalar_lea.sflag [#allocation4], %s308
        %s310 = sand.u32 %s185, 1
        %s311 = smul.addr %s310, 128
        %s312 = scalar_lea.vmem [#allocation7], %s311
        %s313 = smul.u32 16, %s25
        %s314 = smul.u32 16, %s25
        %v316 = vld [vmem:[%s2] sm:$0xf]
        %v317 = vld [vmem:[%s2 + $0x4] sm:$0xf]
        %v318 = vld [vmem:[%s2 + $0x8] sm:$0xf]
        %v319 = vld [vmem:[%s2 + $0xc] sm:$0xf]
        %v320 = vld [vmem:[%s2 + $0x10] sm:$0xf]
        %v321 = vld [vmem:[%s2 + $0x14] sm:$0xf]
        %v322 = vld [vmem:[%s2 + $0x18] sm:$0xf]
        %v323 = vld [vmem:[%s2 + $0x1c] sm:$0xf]
        %v324 = vld [vmem:[%s2 + $0x20] sm:$0xf]
        %v325 = vld [vmem:[%s2 + $0x24] sm:$0xf]
        %v326 = vld [vmem:[%s2 + $0x28] sm:$0xf]
        %v327 = vld [vmem:[%s2 + $0x2c] sm:$0xf]
        %v328 = vld [vmem:[%s2 + $0x30] sm:$0xf]
        %v329 = vld [vmem:[%s2 + $0x34] sm:$0xf]
        %v330 = vld [vmem:[%s2 + $0x38] sm:$0xf]
        %v331 = vld [vmem:[%s2 + $0x3c] sm:$0xf]
        %v332 = vld [vmem:[%s2 + $0x40] sm:$0xf]
        %v333 = vld [vmem:[%s2 + $0x44] sm:$0xf]
        %v334 = vld [vmem:[%s2 + $0x48] sm:$0xf]
        %v335 = vld [vmem:[%s2 + $0x4c] sm:$0xf]
        %v336 = vld [vmem:[%s2 + $0x50] sm:$0xf]
        %v337 = vld [vmem:[%s2 + $0x54] sm:$0xf]
        %v338 = vld [vmem:[%s2 + $0x58] sm:$0xf]
        %v339 = vld [vmem:[%s2 + $0x5c] sm:$0xf]
        %v340 = vld [vmem:[%s2 + $0x60] sm:$0xf]
        %v341 = vld [vmem:[%s2 + $0x64] sm:$0xf]
        %v342 = vld [vmem:[%s2 + $0x68] sm:$0xf]
        %v343 = vld [vmem:[%s2 + $0x6c] sm:$0xf]
        %v344 = vld [vmem:[%s2 + $0x70] sm:$0xf]
        %v345 = vld [vmem:[%s2 + $0x74] sm:$0xf]
        %v346 = vld [vmem:[%s2 + $0x78] sm:$0xf]
        %v347 = vld [vmem:[%s2 + $0x7c] sm:$0xf]
        %v348 = vld [vmem:[%s3] sm:$0xf]
        %v349 = vld [vmem:[%s3 + $0x4] sm:$0xf]
        %v382 = vunpack.c.l.b16 %v316
        %v383 = vunpack.c.l.b16 %v317
        %v384 = vunpack.c.l.b16 %v318
        %v385 = vunpack.c.l.b16 %v319
        %v386 = vunpack.c.l.b16 %v320
        %v387 = vunpack.c.l.b16 %v321
        %v388 = vunpack.c.l.b16 %v322
        %v389 = vunpack.c.l.b16 %v323
        %v390 = vunpack.c.l.b16 %v324
        %v391 = vunpack.c.l.b16 %v325
        %v392 = vunpack.c.l.b16 %v326
        %v393 = vunpack.c.l.b16 %v327
        %v394 = vunpack.c.l.b16 %v328
        %v395 = vunpack.c.l.b16 %v329
        %v396 = vunpack.c.l.b16 %v330
        %v397 = vunpack.c.l.b16 %v331
        %v398 = vunpack.c.l.b16 %v332
        %v399 = vunpack.c.l.b16 %v333
        %v400 = vunpack.c.l.b16 %v334
        %v401 = vunpack.c.l.b16 %v335
        %v402 = vunpack.c.l.b16 %v336
        %v403 = vunpack.c.l.b16 %v337
        %v404 = vunpack.c.l.b16 %v338
        %v405 = vunpack.c.l.b16 %v339
        %v406 = vunpack.c.l.b16 %v340
        %v407 = vunpack.c.l.b16 %v341
        %v408 = vunpack.c.l.b16 %v342
        %v409 = vunpack.c.l.b16 %v343
        %v410 = vunpack.c.l.b16 %v344
        %v411 = vunpack.c.l.b16 %v345
        %v412 = vunpack.c.l.b16 %v346
        %v413 = vunpack.c.l.b16 %v347
        %v414 = vpack.c.b16 %v383, %v382
        %v415 = vpack.c.b16 %v385, %v384
        %v416 = vpack.c.b16 %v387, %v386
        %v417 = vpack.c.b16 %v389, %v388
        %v418 = vpack.c.b16 %v391, %v390
        %v419 = vpack.c.b16 %v393, %v392
        %v420 = vpack.c.b16 %v395, %v394
        %v421 = vpack.c.b16 %v397, %v396
        %v422 = vpack.c.b16 %v399, %v398
        %v423 = vpack.c.b16 %v401, %v400
        %v424 = vpack.c.b16 %v403, %v402
        %v425 = vpack.c.b16 %v405, %v404
        %v426 = vpack.c.b16 %v407, %v406
        %v427 = vpack.c.b16 %v409, %v408
        %v428 = vpack.c.b16 %v411, %v410
        %v429 = vpack.c.b16 %v413, %v412
        %v432 = vunpack.c.l.b16 %v348
        %v433 = vunpack.c.l.b16 %v349
        %v434 = vpack.c.b16 %v433, %v432
        %vm436 = vcmask 130048
        %v438 = vsel %vm436, %v414, 0
        %v441 = vsel %vm436, %v415, 0
        %v444 = vsel %vm436, %v416, 0
        %v447 = vsel %vm436, %v417, 0
        %v450 = vsel %vm436, %v418, 0
        %v453 = vsel %vm436, %v419, 0
        %v456 = vsel %vm436, %v420, 0
        %v459 = vsel %vm436, %v421, 0
        %v462 = vsel %vm436, %v422, 0
        %v465 = vsel %vm436, %v423, 0
        %v468 = vsel %vm436, %v424, 0
        %v471 = vsel %vm436, %v425, 0
        %v474 = vsel %vm436, %v426, 0
        %v477 = vsel %vm436, %v427, 0
        %v480 = vsel %vm436, %v428, 0
        %v483 = vsel %vm436, %v429, 0
        %485 = vmatprep.subr.bf16.mxu0 0
        %486 = vmatpush1.bf16.msra.mxu0 %v434
        %487 = vmatprep.subr.bf16.mxu0 0
        %488 = vmatpush1.bf16.msra.mxu0 0
        %489 = vmatprep.subr.bf16.mxu0 0
        %490 = vmatpush1.bf16.msra.mxu0 0
        %491 = vmatprep.subr.bf16.mxu0 0
        %492 = vmatpush1.bf16.msra.mxu0 0
        %493 = vmatprep.subr.bf16.mxu0 0
        %494 = vmatpush1.bf16.msra.mxu0 0
        %495 = vmatprep.subr.bf16.mxu0 0
        %496 = vmatpush1.bf16.msra.mxu0 0
        %497 = vmatprep.subr.bf16.mxu0 0
        %498 = vmatpush1.bf16.msra.mxu0 0
        %499 = vmatprep.subr.bf16.mxu0 0
        %500 = vmatpush1.bf16.msra.mxu0 0
        %501 = vmatprep.subr.bf16.mxu0 0
        %502 = vmatpush1.bf16.msra.mxu0 0
        %503 = vmatprep.subr.bf16.mxu0 0
        %504 = vmatpush1.bf16.msra.mxu0 0
        %505 = vmatprep.subr.bf16.mxu0 0
        %506 = vmatpush1.bf16.msra.mxu0 0
        %507 = vmatprep.subr.bf16.mxu0 0
        %508 = vmatpush1.bf16.msra.mxu0 0
        %509 = vmatprep.subr.bf16.mxu0 0
        %510 = vmatpush1.bf16.msra.mxu0 0
        %511 = vmatprep.subr.bf16.mxu0 0
        %512 = vmatpush1.bf16.msra.mxu0 0
        %513 = vmatprep.subr.bf16.mxu0 0
        %514 = vmatpush1.bf16.msra.mxu0 0
        %515 = vmatprep.subr.bf16.mxu0 0
        %516 = vmatpush1.bf16.msra.mxu0 0
        %517 = vmatprep.mubr.bf16.mxu0 0
        %518 = vmatmul.mubr.bf16.gmra.mrb[0].mxu0 %v438
        %v519 = vpop.f32.mrb[0].mxu0
        %v520 = vadd.f32 0.0, %v519
        %v521 = vpop.f32.mrb[0].mxu0
        %v522 = vpop.f32.mrb[0].mxu0
        %v523 = vadd.f32 0.0, %v522
        %v524 = vpop.f32.mrb[0].mxu0
        %525 = vmatprep.mubr.bf16.mxu0 0
        %526 = vmatmul.mubr.bf16.gmra.mrb[0].mxu0 %v441
        %v527 = vpop.f32.mrb[0].mxu0
        %v528 = vadd.f32 0.0, %v527
        %v529 = vpop.f32.mrb[0].mxu0
        %v530 = vpop.f32.mrb[0].mxu0
        %v531 = vadd.f32 0.0, %v530
        %v532 = vpop.f32.mrb[0].mxu0
        %533 = vmatprep.mubr.bf16.mxu0 0
        %534 = vmatmul.mubr.bf16.gmra.mrb[0].mxu0 %v444
        %v535 = vpop.f32.mrb[0].mxu0
        %v536 = vadd.f32 0.0, %v535
        %v537 = vpop.f32.mrb[0].mxu0
        %v538 = vpop.f32.mrb[0].mxu0
        %v539 = vadd.f32 0.0, %v538
        %v540 = vpop.f32.mrb[0].mxu0
        %541 = vmatprep.mubr.bf16.mxu0 0
        %542 = vmatmul.mubr.bf16.gmra.mrb[0].mxu0 %v447
        %v543 = vpop.f32.mrb[0].mxu0
        %v544 = vadd.f32 0.0, %v543
        %v545 = vpop.f32.mrb[0].mxu0
        %v546 = vpop.f32.mrb[0].mxu0
        %v547 = vadd.f32 0.0, %v546
        %v548 = vpop.f32.mrb[0].mxu0
        %549 = vmatprep.mubr.bf16.mxu0 0
        %550 = vmatmul.mubr.bf16.gmra.mrb[0].mxu0 %v450
        %v551 = vpop.f32.mrb[0].mxu0
        %v552 = vadd.f32 0.0, %v551
        %v553 = vpop.f32.mrb[0].mxu0
        %v554 = vpop.f32.mrb[0].mxu0
        %v555 = vadd.f32 0.0, %v554
        %v556 = vpop.f32.mrb[0].mxu0
        %557 = vmatprep.mubr.bf16.mxu0 0
        %558 = vmatmul.mubr.bf16.gmra.mrb[0].mxu0 %v453
        %v559 = vpop.f32.mrb[0].mxu0
        %v560 = vadd.f32 0.0, %v559
        %v561 = vpop.f32.mrb[0].mxu0
        %v562 = vpop.f32.mrb[0].mxu0
        %v563 = vadd.f32 0.0, %v562
        %v564 = vpop.f32.mrb[0].mxu0
        %565 = vmatprep.mubr.bf16.mxu0 0
        %566 = vmatmul.mubr.bf16.gmra.mrb[0].mxu0 %v456
        %v567 = vpop.f32.mrb[0].mxu0
        %v568 = vadd.f32 0.0, %v567
        %v569 = vpop.f32.mrb[0].mxu0
        %v570 = vpop.f32.mrb[0].mxu0
        %v571 = vadd.f32 0.0, %v570
        %v572 = vpop.f32.mrb[0].mxu0
        %573 = vmatprep.mubr.bf16.mxu0 0
        %574 = vmatmul.mubr.bf16.gmra.mrb[0].mxu0 %v459
        %v575 = vpop.f32.mrb[0].mxu0
        %v576 = vadd.f32 0.0, %v575
        %v577 = vpop.f32.mrb[0].mxu0
        %v578 = vpop.f32.mrb[0].mxu0
        %v579 = vadd.f32 0.0, %v578
        %v580 = vpop.f32.mrb[0].mxu0
        %581 = vmatprep.mubr.bf16.mxu0 0
        %582 = vmatmul.mubr.bf16.gmra.mrb[0].mxu0 %v462
        %v583 = vpop.f32.mrb[0].mxu0
        %v584 = vadd.f32 0.0, %v583
        %v585 = vpop.f32.mrb[0].mxu0
        %v586 = vpop.f32.mrb[0].mxu0
        %v587 = vadd.f32 0.0, %v586
        %v588 = vpop.f32.mrb[0].mxu0
        %589 = vmatprep.mubr.bf16.mxu0 0
        %590 = vmatmul.mubr.bf16.gmra.mrb[0].mxu0 %v465
        %v591 = vpop.f32.mrb[0].mxu0
        %v592 = vadd.f32 0.0, %v591
        %v593 = vpop.f32.mrb[0].mxu0
        %v594 = vpop.f32.mrb[0].mxu0
        %v595 = vadd.f32 0.0, %v594
        %v596 = vpop.f32.mrb[0].mxu0
        %597 = vmatprep.mubr.bf16.mxu0 0
        %598 = vmatmul.mubr.bf16.gmra.mrb[0].mxu0 %v468
        %v599 = vpop.f32.mrb[0].mxu0
        %v600 = vadd.f32 0.0, %v599
        %v601 = vpop.f32.mrb[0].mxu0
        %v602 = vpop.f32.mrb[0].mxu0
        %v603 = vadd.f32 0.0, %v602
        %v604 = vpop.f32.mrb[0].mxu0
        %605 = vmatprep.mubr.bf16.mxu0 0
        %606 = vmatmul.mubr.bf16.gmra.mrb[0].mxu0 %v471
        %v607 = vpop.f32.mrb[0].mxu0
        %v608 = vadd.f32 0.0, %v607
        %v609 = vpop.f32.mrb[0].mxu0
        %v610 = vpop.f32.mrb[0].mxu0
        %v611 = vadd.f32 0.0, %v610
        %v612 = vpop.f32.mrb[0].mxu0
        %613 = vmatprep.mubr.bf16.mxu0 0
        %614 = vmatmul.mubr.bf16.gmra.mrb[0].mxu0 %v474
        %v615 = vpop.f32.mrb[0].mxu0
        %v616 = vadd.f32 0.0, %v615
        %v617 = vpop.f32.mrb[0].mxu0
        %v618 = vpop.f32.mrb[0].mxu0
        %v619 = vadd.f32 0.0, %v618
        %v620 = vpop.f32.mrb[0].mxu0
        %621 = vmatprep.mubr.bf16.mxu0 0
        %622 = vmatmul.mubr.bf16.gmra.mrb[0].mxu0 %v477
        %v623 = vpop.f32.mrb[0].mxu0
        %v624 = vadd.f32 0.0, %v623
        %v625 = vpop.f32.mrb[0].mxu0
        %v626 = vpop.f32.mrb[0].mxu0
        %v627 = vadd.f32 0.0, %v626
        %v628 = vpop.f32.mrb[0].mxu0
        %629 = vmatprep.mubr.bf16.mxu0 0
        %630 = vmatmul.mubr.bf16.gmra.mrb[0].mxu0 %v480
        %v631 = vpop.f32.mrb[0].mxu0
        %v632 = vadd.f32 0.0, %v631
        %v633 = vpop.f32.mrb[0].mxu0
        %v634 = vpop.f32.mrb[0].mxu0
        %v635 = vadd.f32 0.0, %v634
        %v636 = vpop.f32.mrb[0].mxu0
        %637 = vmatprep.mubr.bf16.mxu0 0
        %638 = vmatmul.mubr.bf16.gmra.mrb[0].mxu0 %v483
        %v639 = vpop.f32.mrb[0].mxu0
        %v640 = vadd.f32 0.0, %v639
        %v641 = vpop.f32.mrb[0].mxu0
        %v642 = vpop.f32.mrb[0].mxu0
        %v643 = vadd.f32 0.0, %v642
        %v644 = vpop.f32.mrb[0].mxu0
        %645 = vdwg.mxu0
        %v646 = vld [vmem:[#allocation2] sm:$0xff]
        %v647 = vld [vmem:[#allocation2 + $0x8] sm:$0xff]
        %v648 = vld [vmem:[#allocation2 + $0x10] sm:$0xff]
        %v649 = vld [vmem:[#allocation2 + $0x18] sm:$0xff]
        %v650 = vld [vmem:[#allocation2 + $0x20] sm:$0xff]
        %v651 = vld [vmem:[#allocation2 + $0x28] sm:$0xff]
        %v652 = vld [vmem:[#allocation2 + $0x30] sm:$0xff]
        %v653 = vld [vmem:[#allocation2 + $0x38] sm:$0xff]
        %v654 = vld [vmem:[#allocation2 + $0x40] sm:$0xff]
        %v655 = vld [vmem:[#allocation2 + $0x48] sm:$0xff]
        %v656 = vld [vmem:[#allocation2 + $0x50] sm:$0xff]
        %v657 = vld [vmem:[#allocation2 + $0x58] sm:$0xff]
        %v658 = vld [vmem:[#allocation2 + $0x60] sm:$0xff]
        %v659 = vld [vmem:[#allocation2 + $0x68] sm:$0xff]
        %v660 = vld [vmem:[#allocation2 + $0x70] sm:$0xff]
        %v661 = vld [vmem:[#allocation2 + $0x78] sm:$0xff]
        %v662 = vld [vmem:[#allocation2 + $0x80] sm:$0xff]
        %v663 = vld [vmem:[#allocation2 + $0x88] sm:$0xff]
        %v664 = vld [vmem:[#allocation2 + $0x90] sm:$0xff]
        %v665 = vld [vmem:[#allocation2 + $0x98] sm:$0xff]
        %v666 = vld [vmem:[#allocation2 + $0xa0] sm:$0xff]
        %v667 = vld [vmem:[#allocation2 + $0xa8] sm:$0xff]
        %v668 = vld [vmem:[#allocation2 + $0xb0] sm:$0xff]
        %v669 = vld [vmem:[#allocation2 + $0xb8] sm:$0xff]
        %v670 = vld [vmem:[#allocation2 + $0xc0] sm:$0xff]
        %v671 = vld [vmem:[#allocation2 + $0xc8] sm:$0xff]
        %v672 = vld [vmem:[#allocation2 + $0xd0] sm:$0xff]
        %v673 = vld [vmem:[#allocation2 + $0xd8] sm:$0xff]
        %v674 = vld [vmem:[#allocation2 + $0xe0] sm:$0xff]
        %v675 = vld [vmem:[#allocation2 + $0xe8] sm:$0xff]
        %v676 = vld [vmem:[#allocation2 + $0xf0] sm:$0xff]
        %v677 = vld [vmem:[#allocation2 + $0xf8] sm:$0xff]
        %v678 = vpack.c.bf16 %v523, %v520
        %v679 = vpack.c.bf16 %v531, %v528
        %v680 = vpack.c.bf16 %v539, %v536
        %v681 = vpack.c.bf16 %v547, %v544
        %v682 = vpack.c.bf16 %v555, %v552
        %v683 = vpack.c.bf16 %v563, %v560
        %v684 = vpack.c.bf16 %v571, %v568
        %v685 = vpack.c.bf16 %v579, %v576
        %v686 = vpack.c.bf16 %v587, %v584
        %v687 = vpack.c.bf16 %v595, %v592
        %v688 = vpack.c.bf16 %v603, %v600
        %v689 = vpack.c.bf16 %v611, %v608
        %v690 = vpack.c.bf16 %v619, %v616
        %v691 = vpack.c.bf16 %v627, %v624
        %v692 = vpack.c.bf16 %v635, %v632
        %v693 = vpack.c.bf16 %v643, %v640
        %v694 = vld [vmem:[%s4] sm:$0x1]
        %v696 = vlaneseq
        %v697 = vshrl.u32 %v696, 7
        %v698 = vsub.s32 0, %v697
        %v699 = vrot.slane %v694, %v698
        %v733 = vunpack.c.l.b16 %v646
        %v734 = vunpack.c.h.b16 %v646
        %v735 = vunpack.c.l.b16 %v647
        %v736 = vunpack.c.h.b16 %v647
        %v737 = vunpack.c.l.b16 %v648
        %v738 = vunpack.c.h.b16 %v648
        %v739 = vunpack.c.l.b16 %v649
        %v740 = vunpack.c.h.b16 %v649
        %v741 = vunpack.c.l.b16 %v650
        %v742 = vunpack.c.h.b16 %v650
        %v743 = vunpack.c.l.b16 %v651
        %v744 = vunpack.c.h.b16 %v651
        %v745 = vunpack.c.l.b16 %v652
        %v746 = vunpack.c.h.b16 %v652
        %v747 = vunpack.c.l.b16 %v653
        %v748 = vunpack.c.h.b16 %v653
        %v749 = vunpack.c.l.b16 %v654
        %v750 = vunpack.c.h.b16 %v654
        %v751 = vunpack.c.l.b16 %v655
        %v752 = vunpack.c.h.b16 %v655
        %v753 = vunpack.c.l.b16 %v656
        %v754 = vunpack.c.h.b16 %v656
        %v755 = vunpack.c.l.b16 %v657
        %v756 = vunpack.c.h.b16 %v657
        %v757 = vunpack.c.l.b16 %v658
        %v758 = vunpack.c.h.b16 %v658
        %v759 = vunpack.c.l.b16 %v659
        %v760 = vunpack.c.h.b16 %v659
        %v761 = vunpack.c.l.b16 %v660
        %v762 = vunpack.c.h.b16 %v660
        %v763 = vunpack.c.l.b16 %v661
        %v764 = vunpack.c.h.b16 %v661
        %v765 = vunpack.c.l.b16 %v662
        %v766 = vunpack.c.h.b16 %v662
        %v767 = vunpack.c.l.b16 %v663
        %v768 = vunpack.c.h.b16 %v663
        %v769 = vunpack.c.l.b16 %v664
        %v770 = vunpack.c.h.b16 %v664
        %v771 = vunpack.c.l.b16 %v665
        %v772 = vunpack.c.h.b16 %v665
        %v773 = vunpack.c.l.b16 %v666
        %v774 = vunpack.c.h.b16 %v666
        %v775 = vunpack.c.l.b16 %v667
        %v776 = vunpack.c.h.b16 %v667
        %v777 = vunpack.c.l.b16 %v668
        %v778 = vunpack.c.h.b16 %v668
        %v779 = vunpack.c.l.b16 %v669
        %v780 = vunpack.c.h.b16 %v669
        %v781 = vunpack.c.l.b16 %v670
        %v782 = vunpack.c.h.b16 %v670
        %v783 = vunpack.c.l.b16 %v671
        %v784 = vunpack.c.h.b16 %v671
        %v785 = vunpack.c.l.b16 %v672
        %v786 = vunpack.c.h.b16 %v672
        %v787 = vunpack.c.l.b16 %v673
        %v788 = vunpack.c.h.b16 %v673
        %v789 = vunpack.c.l.b16 %v674
        %v790 = vunpack.c.h.b16 %v674
        %v791 = vunpack.c.l.b16 %v675
        %v792 = vunpack.c.h.b16 %v675
        %v793 = vunpack.c.l.b16 %v676
        %v794 = vunpack.c.h.b16 %v676
        %v795 = vunpack.c.l.b16 %v677
        %v796 = vunpack.c.h.b16 %v677
        %v797 = vpack.c.b16 %v735, %v733
        %v798 = vpack.c.b16 %v736, %v734
        %v799 = vpack.c.b16 %v739, %v737
        %v800 = vpack.c.b16 %v740, %v738
        %v801 = vpack.c.b16 %v743, %v741
        %v802 = vpack.c.b16 %v744, %v742
        %v803 = vpack.c.b16 %v747, %v745
        %v804 = vpack.c.b16 %v748, %v746
        %v805 = vpack.c.b16 %v751, %v749
        %v806 = vpack.c.b16 %v752, %v750
        %v807 = vpack.c.b16 %v755, %v753
        %v808 = vpack.c.b16 %v756, %v754
        %v809 = vpack.c.b16 %v759, %v757
        %v810 = vpack.c.b16 %v760, %v758
        %v811 = vpack.c.b16 %v763, %v761
        %v812 = vpack.c.b16 %v764, %v762
        %v813 = vpack.c.b16 %v767, %v765
        %v814 = vpack.c.b16 %v768, %v766
        %v815 = vpack.c.b16 %v771, %v769
        %v816 = vpack.c.b16 %v772, %v770
        %v817 = vpack.c.b16 %v775, %v773
        %v818 = vpack.c.b16 %v776, %v774
        %v819 = vpack.c.b16 %v779, %v777
        %v820 = vpack.c.b16 %v780, %v778
        %v821 = vpack.c.b16 %v783, %v781
        %v822 = vpack.c.b16 %v784, %v782
        %v823 = vpack.c.b16 %v787, %v785
        %v824 = vpack.c.b16 %v788, %v786
        %v825 = vpack.c.b16 %v791, %v789
        %v826 = vpack.c.b16 %v792, %v790
        %v827 = vpack.c.b16 %v795, %v793
        %v828 = vpack.c.b16 %v796, %v794
        %861 = vmatprep.subr.bf16.mxu0 0
        %862 = vmatpush1.bf16.msra.mxu0 %v678
        %863 = vmatprep.subr.bf16.mxu0 0
        %864 = vmatpush1.bf16.msra.mxu0 %v679
        %865 = vmatprep.subr.bf16.mxu0 0
        %866 = vmatpush1.bf16.msra.mxu0 %v680
        %867 = vmatprep.subr.bf16.mxu0 0
        %868 = vmatpush1.bf16.msra.mxu0 %v681
        %869 = vmatprep.subr.bf16.mxu0 0
        %870 = vmatpush1.bf16.msra.mxu0 %v682
        %871 = vmatprep.subr.bf16.mxu0 0
        %872 = vmatpush1.bf16.msra.mxu0 %v683
        %873 = vmatprep.subr.bf16.mxu0 0
        %874 = vmatpush1.bf16.msra.mxu0 %v684
        %875 = vmatprep.subr.bf16.mxu0 0
        %876 = vmatpush1.bf16.msra.mxu0 %v685
        %877 = vmatprep.subr.bf16.mxu0 0
        %878 = vmatpush1.bf16.msra.mxu0 %v686
        %879 = vmatprep.subr.bf16.mxu0 0
        %880 = vmatpush1.bf16.msra.mxu0 %v687
        %881 = vmatprep.subr.bf16.mxu0 0
        %882 = vmatpush1.bf16.msra.mxu0 %v688
        %883 = vmatprep.subr.bf16.mxu0 0
        %884 = vmatpush1.bf16.msra.mxu0 %v689
        %885 = vmatprep.subr.bf16.mxu0 0
        %886 = vmatpush1.bf16.msra.mxu0 %v690
        %887 = vmatprep.subr.bf16.mxu0 0
        %888 = vmatpush1.bf16.msra.mxu0 %v691
        %889 = vmatprep.subr.bf16.mxu0 0
        %890 = vmatpush1.bf16.msra.mxu0 %v692
        %891 = vmatprep.subr.bf16.mxu0 0
        %892 = vmatpush1.bf16.msra.mxu0 %v693
        %893 = vmatprep.mubr.bf16.mxu0 %v798
        %894 = vmatmul.mubr.bf16.gmra.mrb[0].mxu0 %v797
        %v895 = vpop.f32.mrb[0].mxu0
        %v896 = vadd.f32 %v699, %v895
        %v897 = vpop.f32.mrb[0].mxu0
        %v898 = vpop.f32.mrb[0].mxu0
        %v899 = vadd.f32 %v699, %v898
        %v900 = vpop.f32.mrb[0].mxu0
        %901 = vmatprep.mubr.bf16.mxu0 %v800
        %902 = vmatmul.mubr.bf16.gmra.mrb[0].mxu0 %v799
        %v903 = vpop.f32.mrb[0].mxu0
        %v904 = vadd.f32 %v699, %v903
        %v905 = vpop.f32.mrb[0].mxu0
        %v906 = vpop.f32.mrb[0].mxu0
        %v907 = vadd.f32 %v699, %v906
        %v908 = vpop.f32.mrb[0].mxu0
        %909 = vmatprep.mubr.bf16.mxu0 %v802
        %910 = vmatmul.mubr.bf16.gmra.mrb[0].mxu0 %v801
        %v911 = vpop.f32.mrb[0].mxu0
        %v912 = vadd.f32 %v699, %v911
        %v913 = vpop.f32.mrb[0].mxu0
        %v914 = vpop.f32.mrb[0].mxu0
        %v915 = vadd.f32 %v699, %v914
        %v916 = vpop.f32.mrb[0].mxu0
        %917 = vmatprep.mubr.bf16.mxu0 %v804
        %918 = vmatmul.mubr.bf16.gmra.mrb[0].mxu0 %v803
        %v919 = vpop.f32.mrb[0].mxu0
        %v920 = vadd.f32 %v699, %v919
        %v921 = vpop.f32.mrb[0].mxu0
        %v922 = vpop.f32.mrb[0].mxu0
        %v923 = vadd.f32 %v699, %v922
        %v924 = vpop.f32.mrb[0].mxu0
        %925 = vmatprep.mubr.bf16.mxu0 %v806
        %926 = vmatmul.mubr.bf16.gmra.mrb[0].mxu0 %v805
        %v927 = vpop.f32.mrb[0].mxu0
        %v928 = vadd.f32 %v699, %v927
        %v929 = vpop.f32.mrb[0].mxu0
        %v930 = vpop.f32.mrb[0].mxu0
        %v931 = vadd.f32 %v699, %v930
        %v932 = vpop.f32.mrb[0].mxu0
        %933 = vmatprep.mubr.bf16.mxu0 %v808
        %934 = vmatmul.mubr.bf16.gmra.mrb[0].mxu0 %v807
        %v935 = vpop.f32.mrb[0].mxu0
        %v936 = vadd.f32 %v699, %v935
        %v937 = vpop.f32.mrb[0].mxu0
        %v938 = vpop.f32.mrb[0].mxu0
        %v939 = vadd.f32 %v699, %v938
        %v940 = vpop.f32.mrb[0].mxu0
        %941 = vmatprep.mubr.bf16.mxu0 %v810
        %942 = vmatmul.mubr.bf16.gmra.mrb[0].mxu0 %v809
        %v943 = vpop.f32.mrb[0].mxu0
        %v944 = vadd.f32 %v699, %v943
        %v945 = vpop.f32.mrb[0].mxu0
        %v946 = vpop.f32.mrb[0].mxu0
        %v947 = vadd.f32 %v699, %v946
        %v948 = vpop.f32.mrb[0].mxu0
        %949 = vmatprep.mubr.bf16.mxu0 %v812
        %950 = vmatmul.mubr.bf16.gmra.mrb[0].mxu0 %v811
        %v951 = vpop.f32.mrb[0].mxu0
        %v952 = vadd.f32 %v699, %v951
        %v953 = vpop.f32.mrb[0].mxu0
        %v954 = vpop.f32.mrb[0].mxu0
        %v955 = vadd.f32 %v699, %v954
        %v956 = vpop.f32.mrb[0].mxu0
        %957 = vmatprep.mubr.bf16.mxu0 %v814
        %958 = vmatmul.mubr.bf16.gmra.mrb[0].mxu0 %v813
        %v959 = vpop.f32.mrb[0].mxu0
        %v960 = vadd.f32 %v699, %v959
        %v961 = vpop.f32.mrb[0].mxu0
        %v962 = vpop.f32.mrb[0].mxu0
        %v963 = vadd.f32 %v699, %v962
        %v964 = vpop.f32.mrb[0].mxu0
        %965 = vmatprep.mubr.bf16.mxu0 %v816
        %966 = vmatmul.mubr.bf16.gmra.mrb[0].mxu0 %v815
        %v967 = vpop.f32.mrb[0].mxu0
        %v968 = vadd.f32 %v699, %v967
        %v969 = vpop.f32.mrb[0].mxu0
        %v970 = vpop.f32.mrb[0].mxu0
        %v971 = vadd.f32 %v699, %v970
        %v972 = vpop.f32.mrb[0].mxu0
        %973 = vmatprep.mubr.bf16.mxu0 %v818
        %974 = vmatmul.mubr.bf16.gmra.mrb[0].mxu0 %v817
        %v975 = vpop.f32.mrb[0].mxu0
        %v976 = vadd.f32 %v699, %v975
        %v977 = vpop.f32.mrb[0].mxu0
        %v978 = vpop.f32.mrb[0].mxu0
        %v979 = vadd.f32 %v699, %v978
        %v980 = vpop.f32.mrb[0].mxu0
        %981 = vmatprep.mubr.bf16.mxu0 %v820
        %982 = vmatmul.mubr.bf16.gmra.mrb[0].mxu0 %v819
        %v983 = vpop.f32.mrb[0].mxu0
        %v984 = vadd.f32 %v699, %v983
        %v985 = vpop.f32.mrb[0].mxu0
        %v986 = vpop.f32.mrb[0].mxu0
        %v987 = vadd.f32 %v699, %v986
        %v988 = vpop.f32.mrb[0].mxu0
        %989 = vmatprep.mubr.bf16.mxu0 %v822
        %990 = vmatmul.mubr.bf16.gmra.mrb[0].mxu0 %v821
        %v991 = vpop.f32.mrb[0].mxu0
        %v992 = vadd.f32 %v699, %v991
        %v993 = vpop.f32.mrb[0].mxu0
        %v994 = vpop.f32.mrb[0].mxu0
        %v995 = vadd.f32 %v699, %v994
        %v996 = vpop.f32.mrb[0].mxu0
        %997 = vmatprep.mubr.bf16.mxu0 %v824
        %998 = vmatmul.mubr.bf16.gmra.mrb[0].mxu0 %v823
        %v999 = vpop.f32.mrb[0].mxu0
        %v1000 = vadd.f32 %v699, %v999
        %v1001 = vpop.f32.mrb[0].mxu0
        %v1002 = vpop.f32.mrb[0].mxu0
        %v1003 = vadd.f32 %v699, %v1002
        %v1004 = vpop.f32.mrb[0].mxu0
        %1005 = vmatprep.mubr.bf16.mxu0 %v826
        %1006 = vmatmul.mubr.bf16.gmra.mrb[0].mxu0 %v825
        %v1007 = vpop.f32.mrb[0].mxu0
        %v1008 = vadd.f32 %v699, %v1007
        %v1009 = vpop.f32.mrb[0].mxu0
        %v1010 = vpop.f32.mrb[0].mxu0
        %v1011 = vadd.f32 %v699, %v1010
        %v1012 = vpop.f32.mrb[0].mxu0
        %1013 = vmatprep.mubr.bf16.mxu0 %v828
        %1014 = vmatmul.mubr.bf16.gmra.mrb[0].mxu0 %v827
        %v1015 = vpop.f32.mrb[0].mxu0
        %v1016 = vadd.f32 %v699, %v1015
        %v1017 = vpop.f32.mrb[0].mxu0
        %v1018 = vpop.f32.mrb[0].mxu0
        %v1019 = vadd.f32 %v699, %v1018
        %v1020 = vpop.f32.mrb[0].mxu0
        %1021 = vdwg.mxu0
        %v1022 = vmax.f32 %v896, 0.0
        %v1023 = vmax.f32 %v899, 0.0
        %v1024 = vmax.f32 %v904, 0.0
        %v1025 = vmax.f32 %v907, 0.0
        %v1026 = vmax.f32 %v912, 0.0
        %v1027 = vmax.f32 %v915, 0.0
        %v1028 = vmax.f32 %v920, 0.0
        %v1029 = vmax.f32 %v923, 0.0
        %v1030 = vmax.f32 %v928, 0.0
        %v1031 = vmax.f32 %v931, 0.0
        %v1032 = vmax.f32 %v936, 0.0
        %v1033 = vmax.f32 %v939, 0.0
        %v1034 = vmax.f32 %v944, 0.0
        %v1035 = vmax.f32 %v947, 0.0
        %v1036 = vmax.f32 %v952, 0.0
        %v1037 = vmax.f32 %v955, 0.0
        %v1038 = vmax.f32 %v960, 0.0
        %v1039 = vmax.f32 %v963, 0.0
        %v1040 = vmax.f32 %v968, 0.0
        %v1041 = vmax.f32 %v971, 0.0
        %v1042 = vmax.f32 %v976, 0.0
        %v1043 = vmax.f32 %v979, 0.0
        %v1044 = vmax.f32 %v984, 0.0
        %v1045 = vmax.f32 %v987, 0.0
        %v1046 = vmax.f32 %v992, 0.0
        %v1047 = vmax.f32 %v995, 0.0
        %v1048 = vmax.f32 %v1000, 0.0
        %v1049 = vmax.f32 %v1003, 0.0
        %v1050 = vmax.f32 %v1008, 0.0
        %v1051 = vmax.f32 %v1011, 0.0
        %v1052 = vmax.f32 %v1016, 0.0
        %v1053 = vmax.f32 %v1019, 0.0
        %v1054 = vpack.c.bf16 %v1023, %v1022
        %v1055 = vpack.c.bf16 %v1025, %v1024
        %v1056 = vpack.c.bf16 %v1027, %v1026
        %v1057 = vpack.c.bf16 %v1029, %v1028
        %v1058 = vpack.c.bf16 %v1031, %v1030
        %v1059 = vpack.c.bf16 %v1033, %v1032
        %v1060 = vpack.c.bf16 %v1035, %v1034
        %v1061 = vpack.c.bf16 %v1037, %v1036
        %v1062 = vpack.c.bf16 %v1039, %v1038
        %v1063 = vpack.c.bf16 %v1041, %v1040
        %v1064 = vpack.c.bf16 %v1043, %v1042
        %v1065 = vpack.c.bf16 %v1045, %v1044
        %v1066 = vpack.c.bf16 %v1047, %v1046
        %v1067 = vpack.c.bf16 %v1049, %v1048
        %v1068 = vpack.c.bf16 %v1051, %v1050
        %v1069 = vpack.c.bf16 %v1053, %v1052
        %v1070 = vld [vmem:[%s5] sm:$0xf]
        %v1071 = vld [vmem:[%s5 + $0x4] sm:$0xf]
        %v1072 = vld [vmem:[%s5 + $0x8] sm:$0xf]
        %v1073 = vld [vmem:[%s5 + $0xc] sm:$0xf]
        %v1074 = vld [vmem:[%s5 + $0x10] sm:$0xf]
        %v1075 = vld [vmem:[%s5 + $0x14] sm:$0xf]
        %v1076 = vld [vmem:[%s5 + $0x18] sm:$0xf]
        %v1077 = vld [vmem:[%s5 + $0x1c] sm:$0xf]
        %v1078 = vld [vmem:[%s5 + $0x20] sm:$0xf]
        %v1079 = vld [vmem:[%s5 + $0x24] sm:$0xf]
        %v1080 = vld [vmem:[%s5 + $0x28] sm:$0xf]
        %v1081 = vld [vmem:[%s5 + $0x2c] sm:$0xf]
        %v1082 = vld [vmem:[%s5 + $0x30] sm:$0xf]
        %v1083 = vld [vmem:[%s5 + $0x34] sm:$0xf]
        %v1084 = vld [vmem:[%s5 + $0x38] sm:$0xf]
        %v1085 = vld [vmem:[%s5 + $0x3c] sm:$0xf]
        %v1102 = vunpack.c.l.b16 %v1070
        %v1103 = vunpack.c.l.b16 %v1071
        %v1104 = vunpack.c.l.b16 %v1072
        %v1105 = vunpack.c.l.b16 %v1073
        %v1106 = vunpack.c.l.b16 %v1074
        %v1107 = vunpack.c.l.b16 %v1075
        %v1108 = vunpack.c.l.b16 %v1076
        %v1109 = vunpack.c.l.b16 %v1077
        %v1110 = vunpack.c.l.b16 %v1078
        %v1111 = vunpack.c.l.b16 %v1079
        %v1112 = vunpack.c.l.b16 %v1080
        %v1113 = vunpack.c.l.b16 %v1081
        %v1114 = vunpack.c.l.b16 %v1082
        %v1115 = vunpack.c.l.b16 %v1083
        %v1116 = vunpack.c.l.b16 %v1084
        %v1117 = vunpack.c.l.b16 %v1085
        %v1118 = vpack.c.b16 %v1103, %v1102
        %v1119 = vpack.c.b16 %v1105, %v1104
        %v1120 = vpack.c.b16 %v1107, %v1106
        %v1121 = vpack.c.b16 %v1109, %v1108
        %v1122 = vpack.c.b16 %v1111, %v1110
        %v1123 = vpack.c.b16 %v1113, %v1112
        %v1124 = vpack.c.b16 %v1115, %v1114
        %v1125 = vpack.c.b16 %v1117, %v1116
        %1134 = vmatprep.subr.bf16.mxu0 0
        %1135 = vmatpush1.bf16.msra.mxu0 %v1118
        %1136 = vmatprep.subr.bf16.mxu0 0
        %1137 = vmatpush1.bf16.msra.mxu0 %v1119
        %1138 = vmatprep.subr.bf16.mxu0 0
        %1139 = vmatpush1.bf16.msra.mxu0 %v1120
        %1140 = vmatprep.subr.bf16.mxu0 0
        %1141 = vmatpush1.bf16.msra.mxu0 %v1121
        %1142 = vmatprep.subr.bf16.mxu0 0
        %1143 = vmatpush1.bf16.msra.mxu0 %v1122
        %1144 = vmatprep.subr.bf16.mxu0 0
        %1145 = vmatpush1.bf16.msra.mxu0 %v1123
        %1146 = vmatprep.subr.bf16.mxu0 0
        %1147 = vmatpush1.bf16.msra.mxu0 %v1124
        %1148 = vmatprep.subr.bf16.mxu0 0
        %1149 = vmatpush1.bf16.msra.mxu0 %v1125
        %1150 = vmatprep.subr.bf16.mxu0 0
        %1151 = vmatpush1.bf16.msra.mxu0 0
        %1152 = vmatprep.subr.bf16.mxu0 0
        %1153 = vmatpush1.bf16.msra.mxu0 0
        %1154 = vmatprep.subr.bf16.mxu0 0
        %1155 = vmatpush1.bf16.msra.mxu0 0
        %1156 = vmatprep.subr.bf16.mxu0 0
        %1157 = vmatpush1.bf16.msra.mxu0 0
        %1158 = vmatprep.subr.bf16.mxu0 0
        %1159 = vmatpush1.bf16.msra.mxu0 0
        %1160 = vmatprep.subr.bf16.mxu0 0
        %1161 = vmatpush1.bf16.msra.mxu0 0
        %1162 = vmatprep.subr.bf16.mxu0 0
        %1163 = vmatpush1.bf16.msra.mxu0 0
        %1164 = vmatprep.subr.bf16.mxu0 0
        %1165 = vmatpush1.bf16.msra.mxu0 0
        %1166 = vmatprep.mubr.bf16.mxu0 0
        %1167 = vmatmul.mubr.bf16.gmra.mrb[0].mxu0 %v1054
        %v1168 = vpop.f32.mrb[0].mxu0
        %v1169 = vadd.f32 0.0, %v1168
        %v1170 = vpop.f32.mrb[0].mxu0
        %v1171 = vpop.f32.mrb[0].mxu0
        %v1172 = vadd.f32 0.0, %v1171
        %v1173 = vpop.f32.mrb[0].mxu0
        %1174 = vmatprep.mubr.bf16.mxu0 0
        %1175 = vmatmul.mubr.bf16.gmra.mrb[0].mxu0 %v1055
        %v1176 = vpop.f32.mrb[0].mxu0
        %v1177 = vadd.f32 0.0, %v1176
        %v1178 = vpop.f32.mrb[0].mxu0
        %v1179 = vpop.f32.mrb[0].mxu0
        %v1180 = vadd.f32 0.0, %v1179
        %v1181 = vpop.f32.mrb[0].mxu0
        %1182 = vmatprep.mubr.bf16.mxu0 0
        %1183 = vmatmul.mubr.bf16.gmra.mrb[0].mxu0 %v1056
        %v1184 = vpop.f32.mrb[0].mxu0
        %v1185 = vadd.f32 0.0, %v1184
        %v1186 = vpop.f32.mrb[0].mxu0
        %v1187 = vpop.f32.mrb[0].mxu0
        %v1188 = vadd.f32 0.0, %v1187
        %v1189 = vpop.f32.mrb[0].mxu0
        %1190 = vmatprep.mubr.bf16.mxu0 0
        %1191 = vmatmul.mubr.bf16.gmra.mrb[0].mxu0 %v1057
        %v1192 = vpop.f32.mrb[0].mxu0
        %v1193 = vadd.f32 0.0, %v1192
        %v1194 = vpop.f32.mrb[0].mxu0
        %v1195 = vpop.f32.mrb[0].mxu0
        %v1196 = vadd.f32 0.0, %v1195
        %v1197 = vpop.f32.mrb[0].mxu0
        %1198 = vmatprep.mubr.bf16.mxu0 0
        %1199 = vmatmul.mubr.bf16.gmra.mrb[0].mxu0 %v1058
        %v1200 = vpop.f32.mrb[0].mxu0
        %v1201 = vadd.f32 0.0, %v1200
        %v1202 = vpop.f32.mrb[0].mxu0
        %v1203 = vpop.f32.mrb[0].mxu0
        %v1204 = vadd.f32 0.0, %v1203
        %v1205 = vpop.f32.mrb[0].mxu0
        %1206 = vmatprep.mubr.bf16.mxu0 0
        %1207 = vmatmul.mubr.bf16.gmra.mrb[0].mxu0 %v1059
        %v1208 = vpop.f32.mrb[0].mxu0
        %v1209 = vadd.f32 0.0, %v1208
        %v1210 = vpop.f32.mrb[0].mxu0
        %v1211 = vpop.f32.mrb[0].mxu0
        %v1212 = vadd.f32 0.0, %v1211
        %v1213 = vpop.f32.mrb[0].mxu0
        %1214 = vmatprep.mubr.bf16.mxu0 0
        %1215 = vmatmul.mubr.bf16.gmra.mrb[0].mxu0 %v1060
        %v1216 = vpop.f32.mrb[0].mxu0
        %v1217 = vadd.f32 0.0, %v1216
        %v1218 = vpop.f32.mrb[0].mxu0
        %v1219 = vpop.f32.mrb[0].mxu0
        %v1220 = vadd.f32 0.0, %v1219
        %v1221 = vpop.f32.mrb[0].mxu0
        %1222 = vmatprep.mubr.bf16.mxu0 0
        %1223 = vmatmul.mubr.bf16.gmra.mrb[0].mxu0 %v1061
        %v1224 = vpop.f32.mrb[0].mxu0
        %v1225 = vadd.f32 0.0, %v1224
        %v1226 = vpop.f32.mrb[0].mxu0
        %v1227 = vpop.f32.mrb[0].mxu0
        %v1228 = vadd.f32 0.0, %v1227
        %v1229 = vpop.f32.mrb[0].mxu0
        %1230 = vmatprep.mubr.bf16.mxu0 0
        %1231 = vmatmul.mubr.bf16.gmra.mrb[0].mxu0 %v1062
        %v1232 = vpop.f32.mrb[0].mxu0
        %v1233 = vadd.f32 0.0, %v1232
        %v1234 = vpop.f32.mrb[0].mxu0
        %v1235 = vpop.f32.mrb[0].mxu0
        %v1236 = vadd.f32 0.0, %v1235
        %v1237 = vpop.f32.mrb[0].mxu0
        %1238 = vmatprep.mubr.bf16.mxu0 0
        %1239 = vmatmul.mubr.bf16.gmra.mrb[0].mxu0 %v1063
        %v1240 = vpop.f32.mrb[0].mxu0
        %v1241 = vadd.f32 0.0, %v1240
        %v1242 = vpop.f32.mrb[0].mxu0
        %v1243 = vpop.f32.mrb[0].mxu0
        %v1244 = vadd.f32 0.0, %v1243
        %v1245 = vpop.f32.mrb[0].mxu0
        %1246 = vmatprep.mubr.bf16.mxu0 0
        %1247 = vmatmul.mubr.bf16.gmra.mrb[0].mxu0 %v1064
        %v1248 = vpop.f32.mrb[0].mxu0
        %v1249 = vadd.f32 0.0, %v1248
        %v1250 = vpop.f32.mrb[0].mxu0
        %v1251 = vpop.f32.mrb[0].mxu0
        %v1252 = vadd.f32 0.0, %v1251
        %v1253 = vpop.f32.mrb[0].mxu0
        %1254 = vmatprep.mubr.bf16.mxu0 0
        %1255 = vmatmul.mubr.bf16.gmra.mrb[0].mxu0 %v1065
        %v1256 = vpop.f32.mrb[0].mxu0
        %v1257 = vadd.f32 0.0, %v1256
        %v1258 = vpop.f32.mrb[0].mxu0
        %v1259 = vpop.f32.mrb[0].mxu0
        %v1260 = vadd.f32 0.0, %v1259
        %v1261 = vpop.f32.mrb[0].mxu0
        %1262 = vmatprep.mubr.bf16.mxu0 0
        %1263 = vmatmul.mubr.bf16.gmra.mrb[0].mxu0 %v1066
        %v1264 = vpop.f32.mrb[0].mxu0
        %v1265 = vadd.f32 0.0, %v1264
        %v1266 = vpop.f32.mrb[0].mxu0
        %v1267 = vpop.f32.mrb[0].mxu0
        %v1268 = vadd.f32 0.0, %v1267
        %v1269 = vpop.f32.mrb[0].mxu0
        %1270 = vmatprep.mubr.bf16.mxu0 0
        %1271 = vmatmul.mubr.bf16.gmra.mrb[0].mxu0 %v1067
        %v1272 = vpop.f32.mrb[0].mxu0
        %v1273 = vadd.f32 0.0, %v1272
        %v1274 = vpop.f32.mrb[0].mxu0
        %v1275 = vpop.f32.mrb[0].mxu0
        %v1276 = vadd.f32 0.0, %v1275
        %v1277 = vpop.f32.mrb[0].mxu0
        %1278 = vmatprep.mubr.bf16.mxu0 0
        %1279 = vmatmul.mubr.bf16.gmra.mrb[0].mxu0 %v1068
        %v1280 = vpop.f32.mrb[0].mxu0
        %v1281 = vadd.f32 0.0, %v1280
        %v1282 = vpop.f32.mrb[0].mxu0
        %v1283 = vpop.f32.mrb[0].mxu0
        %v1284 = vadd.f32 0.0, %v1283
        %v1285 = vpop.f32.mrb[0].mxu0
        %1286 = vmatprep.mubr.bf16.mxu0 0
        %1287 = vmatmul.mubr.bf16.gmra.mrb[0].mxu0 %v1069
        %v1288 = vpop.f32.mrb[0].mxu0
        %v1289 = vadd.f32 0.0, %v1288
        %v1290 = vpop.f32.mrb[0].mxu0
        %v1291 = vpop.f32.mrb[0].mxu0
        %v1292 = vadd.f32 0.0, %v1291
        %v1293 = vpop.f32.mrb[0].mxu0
        %1294 = vdwg.mxu0
        %v1295 = vld [vmem:[%s282] sm:$0xff]
        %v1296 = vld [vmem:[%s282 + $0x8] sm:$0xff]
        %v1297 = vld [vmem:[%s282 + $0x10] sm:$0xff]
        %v1298 = vld [vmem:[%s282 + $0x18] sm:$0xff]
        %v1299 = vld [vmem:[%s282 + $0x20] sm:$0xff]
        %v1300 = vld [vmem:[%s282 + $0x28] sm:$0xff]
        %v1301 = vld [vmem:[%s282 + $0x30] sm:$0xff]
        %v1302 = vld [vmem:[%s282 + $0x38] sm:$0xff]
        %v1303 = vld [vmem:[%s282 + $0x40] sm:$0xff]
        %v1304 = vld [vmem:[%s282 + $0x48] sm:$0xff]
        %v1305 = vld [vmem:[%s282 + $0x50] sm:$0xff]
        %v1306 = vld [vmem:[%s282 + $0x58] sm:$0xff]
        %v1307 = vld [vmem:[%s282 + $0x60] sm:$0xff]
        %v1308 = vld [vmem:[%s282 + $0x68] sm:$0xff]
        %v1309 = vld [vmem:[%s282 + $0x70] sm:$0xff]
        %v1310 = vld [vmem:[%s282 + $0x78] sm:$0xff]
        %v1311 = vpack.c.bf16 %v1172, %v1169
        %v1312 = vpack.c.bf16 %v1180, %v1177
        %v1313 = vpack.c.bf16 %v1188, %v1185
        %v1314 = vpack.c.bf16 %v1196, %v1193
        %v1315 = vpack.c.bf16 %v1204, %v1201
        %v1316 = vpack.c.bf16 %v1212, %v1209
        %v1317 = vpack.c.bf16 %v1220, %v1217
        %v1318 = vpack.c.bf16 %v1228, %v1225
        %v1319 = vpack.c.bf16 %v1236, %v1233
        %v1320 = vpack.c.bf16 %v1244, %v1241
        %v1321 = vpack.c.bf16 %v1252, %v1249
        %v1322 = vpack.c.bf16 %v1260, %v1257
        %v1323 = vpack.c.bf16 %v1268, %v1265
        %v1324 = vpack.c.bf16 %v1276, %v1273
        %v1325 = vpack.c.bf16 %v1284, %v1281
        %v1326 = vpack.c.bf16 %v1292, %v1289
        %v1327 = vld [vmem:[%s6] sm:$0x1]
        %v1329 = vlaneseq
        %v1330 = vshrl.u32 %v1329, 7
        %v1331 = vsub.s32 0, %v1330
        %v1332 = vrot.slane %v1327, %v1331
        %v1350 = vunpack.c.l.b16 %v1295
        %v1351 = vunpack.c.h.b16 %v1295
        %v1352 = vunpack.c.l.b16 %v1296
        %v1353 = vunpack.c.h.b16 %v1296
        %v1354 = vunpack.c.l.b16 %v1297
        %v1355 = vunpack.c.h.b16 %v1297
        %v1356 = vunpack.c.l.b16 %v1298
        %v1357 = vunpack.c.h.b16 %v1298
        %v1358 = vunpack.c.l.b16 %v1299
        %v1359 = vunpack.c.h.b16 %v1299
        %v1360 = vunpack.c.l.b16 %v1300
        %v1361 = vunpack.c.h.b16 %v1300
        %v1362 = vunpack.c.l.b16 %v1301
        %v1363 = vunpack.c.h.b16 %v1301
        %v1364 = vunpack.c.l.b16 %v1302
        %v1365 = vunpack.c.h.b16 %v1302
        %v1366 = vunpack.c.l.b16 %v1303
        %v1367 = vunpack.c.h.b16 %v1303
        %v1368 = vunpack.c.l.b16 %v1304
        %v1369 = vunpack.c.h.b16 %v1304
        %v1370 = vunpack.c.l.b16 %v1305
        %v1371 = vunpack.c.h.b16 %v1305
        %v1372 = vunpack.c.l.b16 %v1306
        %v1373 = vunpack.c.h.b16 %v1306
        %v1374 = vunpack.c.l.b16 %v1307
        %v1375 = vunpack.c.h.b16 %v1307
        %v1376 = vunpack.c.l.b16 %v1308
        %v1377 = vunpack.c.h.b16 %v1308
        %v1378 = vunpack.c.l.b16 %v1309
        %v1379 = vunpack.c.h.b16 %v1309
        %v1380 = vunpack.c.l.b16 %v1310
        %v1381 = vunpack.c.h.b16 %v1310
        %v1382 = vpack.c.b16 %v1352, %v1350
        %v1383 = vpack.c.b16 %v1353, %v1351
        %v1384 = vpack.c.b16 %v1356, %v1354
        %v1385 = vpack.c.b16 %v1357, %v1355
        %v1386 = vpack.c.b16 %v1360, %v1358
        %v1387 = vpack.c.b16 %v1361, %v1359
        %v1388 = vpack.c.b16 %v1364, %v1362
        %v1389 = vpack.c.b16 %v1365, %v1363
        %v1390 = vpack.c.b16 %v1368, %v1366
        %v1391 = vpack.c.b16 %v1369, %v1367
        %v1392 = vpack.c.b16 %v1372, %v1370
        %v1393 = vpack.c.b16 %v1373, %v1371
        %v1394 = vpack.c.b16 %v1376, %v1374
        %v1395 = vpack.c.b16 %v1377, %v1375
        %v1396 = vpack.c.b16 %v1380, %v1378
        %v1397 = vpack.c.b16 %v1381, %v1379
        %1414 = vmatprep.subr.bf16.mxu0 0
        %1415 = vmatpush1.bf16.msra.mxu0 %v1311
        %1416 = vmatprep.subr.bf16.mxu0 0
        %1417 = vmatpush1.bf16.msra.mxu0 %v1312
        %1418 = vmatprep.subr.bf16.mxu0 0
        %1419 = vmatpush1.bf16.msra.mxu0 %v1313
        %1420 = vmatprep.subr.bf16.mxu0 0
        %1421 = vmatpush1.bf16.msra.mxu0 %v1314
        %1422 = vmatprep.subr.bf16.mxu0 0
        %1423 = vmatpush1.bf16.msra.mxu0 %v1315
        %1424 = vmatprep.subr.bf16.mxu0 0
        %1425 = vmatpush1.bf16.msra.mxu0 %v1316
        %1426 = vmatprep.subr.bf16.mxu0 0
        %1427 = vmatpush1.bf16.msra.mxu0 %v1317
        %1428 = vmatprep.subr.bf16.mxu0 0
        %1429 = vmatpush1.bf16.msra.mxu0 %v1318
        %1430 = vmatprep.subr.bf16.mxu0 0
        %1431 = vmatpush1.bf16.msra.mxu0 %v1319
        %1432 = vmatprep.subr.bf16.mxu0 0
        %1433 = vmatpush1.bf16.msra.mxu0 %v1320
        %1434 = vmatprep.subr.bf16.mxu0 0
        %1435 = vmatpush1.bf16.msra.mxu0 %v1321
        %1436 = vmatprep.subr.bf16.mxu0 0
        %1437 = vmatpush1.bf16.msra.mxu0 %v1322
        %1438 = vmatprep.subr.bf16.mxu0 0
        %1439 = vmatpush1.bf16.msra.mxu0 %v1323
        %1440 = vmatprep.subr.bf16.mxu0 0
        %1441 = vmatpush1.bf16.msra.mxu0 %v1324
        %1442 = vmatprep.subr.bf16.mxu0 0
        %1443 = vmatpush1.bf16.msra.mxu0 %v1325
        %1444 = vmatprep.subr.bf16.mxu0 0
        %1445 = vmatpush1.bf16.msra.mxu0 %v1326
        %1446 = vmatprep.mubr.bf16.mxu0 %v1383
        %1447 = vmatmul.mubr.bf16.gmra.mrb[0].mxu0 %v1382
        %v1448 = vpop.f32.mrb[0].mxu0
        %v1449 = vadd.f32 %v1332, %v1448
        %v1450 = vpop.f32.mrb[0].mxu0
        %v1451 = vpop.f32.mrb[0].mxu0
        %v1452 = vadd.f32 %v1332, %v1451
        %v1453 = vpop.f32.mrb[0].mxu0
        %1454 = vmatprep.mubr.bf16.mxu0 %v1385
        %1455 = vmatmul.mubr.bf16.gmra.mrb[0].mxu0 %v1384
        %v1456 = vpop.f32.mrb[0].mxu0
        %v1457 = vadd.f32 %v1332, %v1456
        %v1458 = vpop.f32.mrb[0].mxu0
        %v1459 = vpop.f32.mrb[0].mxu0
        %v1460 = vadd.f32 %v1332, %v1459
        %v1461 = vpop.f32.mrb[0].mxu0
        %1462 = vmatprep.mubr.bf16.mxu0 %v1387
        %1463 = vmatmul.mubr.bf16.gmra.mrb[0].mxu0 %v1386
        %v1464 = vpop.f32.mrb[0].mxu0
        %v1465 = vadd.f32 %v1332, %v1464
        %v1466 = vpop.f32.mrb[0].mxu0
        %v1467 = vpop.f32.mrb[0].mxu0
        %v1468 = vadd.f32 %v1332, %v1467
        %v1469 = vpop.f32.mrb[0].mxu0
        %1470 = vmatprep.mubr.bf16.mxu0 %v1389
        %1471 = vmatmul.mubr.bf16.gmra.mrb[0].mxu0 %v1388
        %v1472 = vpop.f32.mrb[0].mxu0
        %v1473 = vadd.f32 %v1332, %v1472
        %v1474 = vpop.f32.mrb[0].mxu0
        %v1475 = vpop.f32.mrb[0].mxu0
        %v1476 = vadd.f32 %v1332, %v1475
        %v1477 = vpop.f32.mrb[0].mxu0
        %1478 = vmatprep.mubr.bf16.mxu0 %v1391
        %1479 = vmatmul.mubr.bf16.gmra.mrb[0].mxu0 %v1390
        %v1480 = vpop.f32.mrb[0].mxu0
        %v1481 = vadd.f32 %v1332, %v1480
        %v1482 = vpop.f32.mrb[0].mxu0
        %v1483 = vpop.f32.mrb[0].mxu0
        %v1484 = vadd.f32 %v1332, %v1483
        %v1485 = vpop.f32.mrb[0].mxu0
        %1486 = vmatprep.mubr.bf16.mxu0 %v1393
        %1487 = vmatmul.mubr.bf16.gmra.mrb[0].mxu0 %v1392
        %v1488 = vpop.f32.mrb[0].mxu0
        %v1489 = vadd.f32 %v1332, %v1488
        %v1490 = vpop.f32.mrb[0].mxu0
        %v1491 = vpop.f32.mrb[0].mxu0
        %v1492 = vadd.f32 %v1332, %v1491
        %v1493 = vpop.f32.mrb[0].mxu0
        %1494 = vmatprep.mubr.bf16.mxu0 %v1395
        %1495 = vmatmul.mubr.bf16.gmra.mrb[0].mxu0 %v1394
        %v1496 = vpop.f32.mrb[0].mxu0
        %v1497 = vadd.f32 %v1332, %v1496
        %v1498 = vpop.f32.mrb[0].mxu0
        %v1499 = vpop.f32.mrb[0].mxu0
        %v1500 = vadd.f32 %v1332, %v1499
        %v1501 = vpop.f32.mrb[0].mxu0
        %1502 = vmatprep.mubr.bf16.mxu0 %v1397
        %1503 = vmatmul.mubr.bf16.gmra.mrb[0].mxu0 %v1396
        %v1504 = vpop.f32.mrb[0].mxu0
        %v1505 = vadd.f32 %v1332, %v1504
        %v1506 = vpop.f32.mrb[0].mxu0
        %v1507 = vpop.f32.mrb[0].mxu0
        %v1508 = vadd.f32 %v1332, %v1507
        %v1509 = vpop.f32.mrb[0].mxu0
        %1510 = vdwg.mxu0
        %v1511 = vlaneseq
        %v1512 = vand.u32 %v1511, 127
        %vm1513 = vcmp.lt.s32.totalorder %v1512, 4
        %v1514 = vsel %vm1513, %v1449, -1e+30
        %v1515 = vsel %vm1513, %v1452, -1e+30
        %v1516 = vsel %vm1513, %v1457, -1e+30
        %v1517 = vsel %vm1513, %v1460, -1e+30
        %v1518 = vsel %vm1513, %v1465, -1e+30
        %v1519 = vsel %vm1513, %v1468, -1e+30
        %v1520 = vsel %vm1513, %v1473, -1e+30
        %v1521 = vsel %vm1513, %v1476, -1e+30
        %v1522 = vsel %vm1513, %v1481, -1e+30
        %v1523 = vsel %vm1513, %v1484, -1e+30
        %v1524 = vsel %vm1513, %v1489, -1e+30
        %v1525 = vsel %vm1513, %v1492, -1e+30
        %v1526 = vsel %vm1513, %v1497, -1e+30
        %v1527 = vsel %vm1513, %v1500, -1e+30
        %v1528 = vsel %vm1513, %v1505, -1e+30
        %v1529 = vsel %vm1513, %v1508, -1e+30
        %1530 = vmax.xlane.f32.xlu0 %v1514
        %v1531 = vpop.xlane.xlu0 %1530
        %1532 = vmax.xlane.f32.xlu0 %v1515
        %v1533 = vpop.xlane.xlu0 %1532
        %1534 = vmax.xlane.f32.xlu0 %v1516
        %v1535 = vpop.xlane.xlu0 %1534
        %1536 = vmax.xlane.f32.xlu0 %v1517
        %v1537 = vpop.xlane.xlu0 %1536
        %1538 = vmax.xlane.f32.xlu0 %v1518
        %v1539 = vpop.xlane.xlu0 %1538
        %1540 = vmax.xlane.f32.xlu0 %v1519
        %v1541 = vpop.xlane.xlu0 %1540
        %1542 = vmax.xlane.f32.xlu0 %v1520
        %v1543 = vpop.xlane.xlu0 %1542
        %1544 = vmax.xlane.f32.xlu0 %v1521
        %v1545 = vpop.xlane.xlu0 %1544
        %1546 = vmax.xlane.f32.xlu0 %v1522
        %v1547 = vpop.xlane.xlu0 %1546
        %1548 = vmax.xlane.f32.xlu0 %v1523
        %v1549 = vpop.xlane.xlu0 %1548
        %1550 = vmax.xlane.f32.xlu0 %v1524
        %v1551 = vpop.xlane.xlu0 %1550
        %1552 = vmax.xlane.f32.xlu0 %v1525
        %v1553 = vpop.xlane.xlu0 %1552
        %1554 = vmax.xlane.f32.xlu0 %v1526
        %v1555 = vpop.xlane.xlu0 %1554
        %1556 = vmax.xlane.f32.xlu0 %v1527
        %v1557 = vpop.xlane.xlu0 %1556
        %1558 = vmax.xlane.f32.xlu0 %v1528
        %v1559 = vpop.xlane.xlu0 %1558
        %1560 = vmax.xlane.f32.xlu0 %v1529
        %v1561 = vpop.xlane.xlu0 %1560
        %v1562 = vsub.f32 %v1514, %v1531
        %v1563 = vsub.f32 %v1515, %v1533
        %v1564 = vsub.f32 %v1516, %v1535
        %v1565 = vsub.f32 %v1517, %v1537
        %v1566 = vsub.f32 %v1518, %v1539
        %v1567 = vsub.f32 %v1519, %v1541
        %v1568 = vsub.f32 %v1520, %v1543
        %v1569 = vsub.f32 %v1521, %v1545
        %v1570 = vsub.f32 %v1522, %v1547
        %v1571 = vsub.f32 %v1523, %v1549
        %v1572 = vsub.f32 %v1524, %v1551
        %v1573 = vsub.f32 %v1525, %v1553
        %v1574 = vsub.f32 %v1526, %v1555
        %v1575 = vsub.f32 %v1527, %v1557
        %v1576 = vsub.f32 %v1528, %v1559
        %v1577 = vsub.f32 %v1529, %v1561
        %v1578 = vmul.f32 %v1562, 1.442695
        %v1579 = vpow.pop %v1578
        %v1580 = vmul.f32 %v1563, 1.442695
        %v1581 = vpow.pop %v1580
        %v1582 = vmul.f32 %v1564, 1.442695
        %v1583 = vpow.pop %v1582
        %v1584 = vmul.f32 %v1565, 1.442695
        %v1585 = vpow.pop %v1584
        %v1586 = vmul.f32 %v1566, 1.442695
        %v1587 = vpow.pop %v1586
        %v1588 = vmul.f32 %v1567, 1.442695
        %v1589 = vpow.pop %v1588
        %v1590 = vmul.f32 %v1568, 1.442695
        %v1591 = vpow.pop %v1590
        %v1592 = vmul.f32 %v1569, 1.442695
        %v1593 = vpow.pop %v1592
        %v1594 = vmul.f32 %v1570, 1.442695
        %v1595 = vpow.pop %v1594
        %v1596 = vmul.f32 %v1571, 1.442695
        %v1597 = vpow.pop %v1596
        %v1598 = vmul.f32 %v1572, 1.442695
        %v1599 = vpow.pop %v1598
        %v1600 = vmul.f32 %v1573, 1.442695
        %v1601 = vpow.pop %v1600
        %v1602 = vmul.f32 %v1574, 1.442695
        %v1603 = vpow.pop %v1602
        %v1604 = vmul.f32 %v1575, 1.442695
        %v1605 = vpow.pop %v1604
        %v1606 = vmul.f32 %v1576, 1.442695
        %v1607 = vpow.pop %v1606
        %v1608 = vmul.f32 %v1577, 1.442695
        %v1609 = vpow.pop %v1608
        %1610 = vadd.xlane.f32.xlu0 %v1579
        %v1611 = vpop.xlane.xlu0 %1610
        %1612 = vadd.xlane.f32.xlu0 %v1581
        %v1613 = vpop.xlane.xlu0 %1612
        %1614 = vadd.xlane.f32.xlu0 %v1583
        %v1615 = vpop.xlane.xlu0 %1614
        %1616 = vadd.xlane.f32.xlu0 %v1585
        %v1617 = vpop.xlane.xlu0 %1616
        %1618 = vadd.xlane.f32.xlu0 %v1587
        %v1619 = vpop.xlane.xlu0 %1618
        %1620 = vadd.xlane.f32.xlu0 %v1589
        %v1621 = vpop.xlane.xlu0 %1620
        %1622 = vadd.xlane.f32.xlu0 %v1591
        %v1623 = vpop.xlane.xlu0 %1622
        %1624 = vadd.xlane.f32.xlu0 %v1593
        %v1625 = vpop.xlane.xlu0 %1624
        %1626 = vadd.xlane.f32.xlu0 %v1595
        %v1627 = vpop.xlane.xlu0 %1626
        %1628 = vadd.xlane.f32.xlu0 %v1597
        %v1629 = vpop.xlane.xlu0 %1628
        %1630 = vadd.xlane.f32.xlu0 %v1599
        %v1631 = vpop.xlane.xlu0 %1630
        %1632 = vadd.xlane.f32.xlu0 %v1601
        %v1633 = vpop.xlane.xlu0 %1632
        %1634 = vadd.xlane.f32.xlu0 %v1603
        %v1635 = vpop.xlane.xlu0 %1634
        %1636 = vadd.xlane.f32.xlu0 %v1605
        %v1637 = vpop.xlane.xlu0 %1636
        %1638 = vadd.xlane.f32.xlu0 %v1607
        %v1639 = vpop.xlane.xlu0 %1638
        %1640 = vadd.xlane.f32.xlu0 %v1609
        %v1641 = vpop.xlane.xlu0 %1640
        %v1642 = vlog2.pop %v1611
        %v1643 = vmul.f32 %v1642, 0.6931472
        %v1644 = vlog2.pop %v1613
        %v1645 = vmul.f32 %v1644, 0.6931472
        %v1646 = vlog2.pop %v1615
        %v1647 = vmul.f32 %v1646, 0.6931472
        %v1648 = vlog2.pop %v1617
        %v1649 = vmul.f32 %v1648, 0.6931472
        %v1650 = vlog2.pop %v1619
        %v1651 = vmul.f32 %v1650, 0.6931472
        %v1652 = vlog2.pop %v1621
        %v1653 = vmul.f32 %v1652, 0.6931472
        %v1654 = vlog2.pop %v1623
        %v1655 = vmul.f32 %v1654, 0.6931472
        %v1656 = vlog2.pop %v1625
        %v1657 = vmul.f32 %v1656, 0.6931472
        %v1658 = vlog2.pop %v1627
        %v1659 = vmul.f32 %v1658, 0.6931472
        %v1660 = vlog2.pop %v1629
        %v1661 = vmul.f32 %v1660, 0.6931472
        %v1662 = vlog2.pop %v1631
        %v1663 = vmul.f32 %v1662, 0.6931472
        %v1664 = vlog2.pop %v1633
        %v1665 = vmul.f32 %v1664, 0.6931472
        %v1666 = vlog2.pop %v1635
        %v1667 = vmul.f32 %v1666, 0.6931472
        %v1668 = vlog2.pop %v1637
        %v1669 = vmul.f32 %v1668, 0.6931472
        %v1670 = vlog2.pop %v1639
        %v1671 = vmul.f32 %v1670, 0.6931472
        %v1672 = vlog2.pop %v1641
        %v1673 = vmul.f32 %v1672, 0.6931472
        %v1674 = vadd.f32 %v1643, %v1531
        %v1675 = vadd.f32 %v1645, %v1533
        %v1676 = vadd.f32 %v1647, %v1535
        %v1677 = vadd.f32 %v1649, %v1537
        %v1678 = vadd.f32 %v1651, %v1539
        %v1679 = vadd.f32 %v1653, %v1541
        %v1680 = vadd.f32 %v1655, %v1543
        %v1681 = vadd.f32 %v1657, %v1545
        %v1682 = vadd.f32 %v1659, %v1547
        %v1683 = vadd.f32 %v1661, %v1549
        %v1684 = vadd.f32 %v1663, %v1551
        %v1685 = vadd.f32 %v1665, %v1553
        %v1686 = vadd.f32 %v1667, %v1555
        %v1687 = vadd.f32 %v1669, %v1557
        %v1688 = vadd.f32 %v1671, %v1559
        %v1689 = vadd.f32 %v1673, %v1561
        %v1690 = vsub.f32 %v1514, %v1674
        %v1691 = vsub.f32 %v1515, %v1675
        %v1692 = vsub.f32 %v1516, %v1676
        %v1693 = vsub.f32 %v1517, %v1677
        %v1694 = vsub.f32 %v1518, %v1678
        %v1695 = vsub.f32 %v1519, %v1679
        %v1696 = vsub.f32 %v1520, %v1680
        %v1697 = vsub.f32 %v1521, %v1681
        %v1698 = vsub.f32 %v1522, %v1682
        %v1699 = vsub.f32 %v1523, %v1683
        %v1700 = vsub.f32 %v1524, %v1684
        %v1701 = vsub.f32 %v1525, %v1685
        %v1702 = vsub.f32 %v1526, %v1686
        %v1703 = vsub.f32 %v1527, %v1687
        %v1704 = vsub.f32 %v1528, %v1688
        %v1705 = vsub.f32 %v1529, %v1689
        %1706 = vst [vmem:[%s312] sm:$0xff] %v1690
        %1707 = vst [vmem:[%s312 + $0x8] sm:$0xff] %v1691
        %1708 = vst [vmem:[%s312 + $0x10] sm:$0xff] %v1692
        %1709 = vst [vmem:[%s312 + $0x18] sm:$0xff] %v1693
        %1710 = vst [vmem:[%s312 + $0x20] sm:$0xff] %v1694
        %1711 = vst [vmem:[%s312 + $0x28] sm:$0xff] %v1695
        %1712 = vst [vmem:[%s312 + $0x30] sm:$0xff] %v1696
        %1713 = vst [vmem:[%s312 + $0x38] sm:$0xff] %v1697
        %1714 = vst [vmem:[%s312 + $0x40] sm:$0xff] %v1698
        %1715 = vst [vmem:[%s312 + $0x48] sm:$0xff] %v1699
        %1716 = vst [vmem:[%s312 + $0x50] sm:$0xff] %v1700
        %1717 = vst [vmem:[%s312 + $0x58] sm:$0xff] %v1701
        %1718 = vst [vmem:[%s312 + $0x60] sm:$0xff] %v1702
        %1719 = vst [vmem:[%s312 + $0x68] sm:$0xff] %v1703
        %1720 = vst [vmem:[%s312 + $0x70] sm:$0xff] %v1704
        %1721 = vst [vmem:[%s312 + $0x78] sm:$0xff] %v1705
        %s1722 = sand.u32 %s185, 1
        %s1723 = scalar_lea.sflag [#allocation4], %s1722
        %s1724 = sand.u32 %s185, 1
        %s1725 = smul.addr %s1724, 128
        %s1726 = scalar_lea.vmem [#allocation7], %s1725
        // Predicated region
        $region57: #{tpu_custom_call.1} parent=47 // pred_check
          %p1727 = pneg %p195
        $region58: #{tpu_custom_call.1} parent=47 // pred_check_branch
          %1729 = sbr.rel (%p1727) target = $region60
        $region59: #{tpu_custom_call.1} parent=47 // pred_region
          %s1730 = smul.u32 16, %s25
          %s1732 = ssub.s32 2048, 2048
          %1733 = vsyncadd %s1723, %s1732
          %s1734 = smul.addr %s1730, 128
          %s1735 = scalar_lea.hbm %s7, %s1734
          %s1736 = sshll.u32 %s1726, 4
          %s1737 = int_to_ptr.vmem [resolvable:$true] %s1736
          %1742 = dma.vmem_to_hbm [thread:$0]  %s1737, 2048, %s1735, %s1723, 128, 128, 8
        $region60: #{tpu_custom_call.1} parent=47 // pred_fallthru
          _
      $region48: #{tpu_custom_call.1} parent=5 // pred_fallthru
        _
      %p1743 = scmp.le.s32.totalorder 2, %s20
      // Predicated region
      $region61: #{tpu_custom_call.1} parent=5 // pred_check
        %p1744 = pneg %p1743
      $region62: #{tpu_custom_call.1} parent=5 // pred_check_branch
        %1746 = sbr.rel (%p1744) target = $region64
      $region63: #{tpu_custom_call.1} parent=5 // pred_region
        %s1747 = ssub.s32 %s20, 2
        // Predicated region
        $region65: #{tpu_custom_call.1} parent=63 // pred_check
          %p1748 = pneg %p201
        $region66: #{tpu_custom_call.1} parent=63 // pred_check_branch
          %1750 = sbr.rel (%p1748) target = $region68
        $region67: #{tpu_custom_call.1} parent=63 // pred_region
          %s1751 = sand.u32 %s186, 1
          %s1752 = scalar_lea.sflag [#allocation4], %s1751
          %s1753 = sand.u32 %s186, 1
          %s1754 = smul.addr %s1753, 128
          %s1755 = scalar_lea.vmem [#allocation7], %s1754
          %1756 = dma.done %s1752, 2048
        $region68: #{tpu_custom_call.1} parent=63 // pred_fallthru
          _
      $region64: #{tpu_custom_call.1} parent=5 // pred_fallthru
        _
    $region6: #{tpu_custom_call.1} parent=1 // loop_footer
      %s24 = sadd.s32 1, %s20
    $region7: #{tpu_custom_call.1} parent=1 // loop_footer_branch
      %19 = sbr.rel target = $region3
    $region8: #{tpu_custom_call.1} parent=1 // loop_exit
      _
    %1757 = vsyncpa [#allocation3], 1
    %s1758 = scalar_lea.sflag [#allocation3], 1
    %1759 = vsyncpa %s1758, 1
    %1760 = vsyncpa [#allocation6], 1
    %s1761 = scalar_lea.sflag [#allocation6], 1
    %1762 = vsyncpa %s1761, 1
    %1763 = vsyncpa [#allocation4], 1
    %s1764 = scalar_lea.sflag [#allocation4], 1
    %1765 = vsyncpa %s1764, 1

</llo_original>
